<compile_context>
chip_gen: v6e
topology: v6e:2x2x1
jax: 0.10.0
libtpu: 0.0.40
codegen_flags: <defaults>
</compile_context>

<pallas_src>
import numpy as np

import jax
import jax.numpy as jnp
from jax.experimental import pallas as pl
from jax.experimental.pallas import tpu as pltpu


# ----------------------------------------------------------------------------
# One-time "module init" packing (hoisted out of the per-call path)
# ----------------------------------------------------------------------------
def _upsample_matrix_np(n_in, n_out):
    """Row-interpolation matrix (n_out, n_in) for bilinear, align_corners=True."""
    if n_in == 1:
        return np.ones((n_out, 1), np.float32)
    src = np.arange(n_out, dtype=np.float64) * (n_in - 1) / (n_out - 1)
    i0 = np.clip(np.floor(src).astype(np.int64), 0, n_in - 2)
    frac = (src - i0).astype(np.float32)
    u = np.zeros((n_out, n_in), np.float32)
    rows = np.arange(n_out)
    u[rows, i0] += 1.0 - frac
    u[rows, i0 + 1] += frac
    return u


def _pack_block_toeplitz(w_hwio, w_out):
    """Pack a (3,3,Cin,Cout) conv weight into 3 block-Toeplitz matrices.

    Returns (3, Cin*(w_out+2), Cout*w_out) with
        WB[ky, ci*(w_out+2) + j, co*w_out + x] = w[ky, j-x, ci, co]  (0<=j-x<=2)
    so that, with rows packed as P[r, ci*(w_out+2) + j] = in_pad[r, j, ci],
        conv_out[y, co*w_out + x] = sum_ky (P[y+ky, :] @ WB[ky])[co*w_out + x].
    """
    w = np.asarray(w_hwio, np.float32)
    kh, kw, cin, cout = w.shape
    seg = w_out + 2
    wb = np.zeros((kh, cin, seg, cout, w_out), np.float32)
    for kx in range(kw):
        for x in range(w_out):
            wb[:, :, x + kx, :, x] = w[:, kx, :, :]
    return wb.reshape(kh, cin * seg, cout * w_out)


def make_up_params(w1_hwio, w2_hwio, h, w, H, W):
    """Build (once) the upsample matrices and packed bf16 conv weights."""
    uh = _upsample_matrix_np(h, 2 * h)                 # (2h, h)
    uw_t = np.ascontiguousarray(_upsample_matrix_np(w, 2 * w).T)   # (w, 2w)
    w1p = _pack_block_toeplitz(w1_hwio, W)             # (3, Cin*(W+2), Cmid*W)
    w2p = _pack_block_toeplitz(w2_hwio, W)             # (3, Cmid*(W+2), Cout*W)
    return (jnp.asarray(uh, jnp.float32),
            jnp.asarray(uw_t, jnp.float32),
            jnp.asarray(w1p, jnp.bfloat16),
            jnp.asarray(w2p, jnp.bfloat16))


# ----------------------------------------------------------------------------
# Fused Up kernel: upsample + pad + concat + conv1 + ReLU + conv2 + ReLU
# ----------------------------------------------------------------------------
def _make_up_kernel(*, C1, C2, H, W, H_up, W_up, Cmid, Cout, oy, ox):
    SEG = W + 2

    def kernel(x2_ref, x1_ref, uh_ref, uwT_ref, w1_ref, w2_ref, o_ref,
               p1_ref, p2_ref):
        # x2_ref : (1, C2, H, W)   f32   skip connection (NCHW)
        # x1_ref : (1, C1, h, w)   f32   low-res input (NCHW, pre-upsample)
        # uh_ref : (H_up, h)       f32   row interpolation matrix
        # uwT_ref: (w, W_up)       f32   column interpolation matrix (transposed)
        # w1_ref : (3, (C1+C2)*SEG, Cmid*W)  bf16   block-Toeplitz conv1 weights
        # w2_ref : (3, Cmid*SEG,    Cout*W)  bf16   block-Toeplitz conv2 weights
        # o_ref  : (1, Cout, H, W) f32   output (NCHW)
        # p1_ref : (H+2, (C1+C2)*SEG) bf16 VMEM   packed/padded conv1 input rows
        # p2_ref : (H+2, Cmid*SEG)    bf16 VMEM   packed/padded conv2 input rows

        # Zero the (small, ~8 KB total) halo buffers; only the interior is
        # rewritten below, the border stays zero = the conv's padding=1.
        p1_ref[...] = jnp.zeros_like(p1_ref)
        p2_ref[...] = jnp.zeros_like(p2_ref)

        # --- Pack x2 (skip connection) channel planes into P1's interior.
        for c in range(C2):
            base = c * SEG
            p1_ref[1:H + 1, base + 1:base + 1 + W] = (
                x2_ref[0, c].astype(jnp.bfloat16))

        # --- Bilinear 2x upsample of x1 (align_corners=True) as two fixed
        #     interpolation matmuls per channel (f32), written into P1's
        #     interior.  The F.pad to x2's size is the static (oy, ox) offset.
        uh = uh_ref[...]
        uw_t = uwT_ref[...]
        for c in range(C1):
            t = jnp.dot(uh, x1_ref[0, c],
                        preferred_element_type=jnp.float32)        # (H_up, w)
            up = jnp.dot(t, uw_t,
                         preferred_element_type=jnp.float32)       # (H_up, W_up)
            base = (C2 + c) * SEG
            p1_ref[1 + oy:1 + oy + H_up,
                   base + 1 + ox:base + 1 + ox + W_up] = up.astype(jnp.bfloat16)

        # --- conv1 (3x3, pad 1, no bias) + ReLU: three block-Toeplitz matmuls.
        acc1 = jnp.zeros((H, Cmid * W), jnp.float32)
        for ky in range(3):
            acc1 = acc1 + jnp.dot(p1_ref[ky:ky + H, :], w1_ref[ky],
                                  preferred_element_type=jnp.float32)
        y1 = jnp.maximum(acc1, 0.0)                                 # (H, Cmid*W)

        # --- Stage the conv1 activation in the second halo buffer (real Cmid
        #     channels only, bf16, never leaves VMEM).
        for cm in range(Cmid):
            base = cm * SEG
            p2_ref[1:H + 1, base + 1:base + 1 + W] = (
                y1[:, cm * W:(cm + 1) * W].astype(jnp.bfloat16))

        # --- conv2 (3x3, pad 1, no bias) + ReLU; output columns are packed
        #     (co, x) so the result stores directly as NCHW channel planes.
        acc2 = jnp.zeros((H, Cout * W), jnp.float32)
        for ky in range(3):
            acc2 = acc2 + jnp.dot(p2_ref[ky:ky + H, :], w2_ref[ky],
                                  preferred_element_type=jnp.float32)
        y2 = jnp.maximum(acc2, 0.0)                                 # (H, Cout*W)

        for co in range(Cout):
            o_ref[0, co] = y2[:, co * W:(co + 1) * W]

    return kernel


@jax.jit
def up_forward(x1_nchw, x2_nchw, uh, uwT, w1_packed, w2_packed):
    """Forward of Up (bilinear=True, no norm). Inputs/outputs are NCHW f32."""
    B, C1, h, w = x1_nchw.shape
    B2, C2, H, W = x2_nchw.shape
    assert B == B2
    SEG = W + 2
    Cmid = w1_packed.shape[2] // W
    Cout = w2_packed.shape[2] // W
    assert w1_packed.shape[1] == (C1 + C2) * SEG
    assert w2_packed.shape[1] == Cmid * SEG
    H_up, W_up = uh.shape[0], uwT.shape[1]
    assert uh.shape[1] == h and uwT.shape[0] == w

    diffY, diffX = H - H_up, W - W_up
    if diffY < 0 or diffX < 0:
        # TODO(synk): negative diffs (cropping, as F.pad with negative values) unsupported.
        raise NotImplementedError("x1 larger than x2 after upsample is unsupported")
    oy, ox = diffY // 2, diffX // 2

    kernel = _make_up_kernel(C1=C1, C2=C2, H=H, W=W, H_up=H_up, W_up=W_up,
                             Cmid=Cmid, Cout=Cout, oy=oy, ox=ox)

    return pl.pallas_call(
        kernel,
        out_shape=jax.ShapeDtypeStruct((B, Cout, H, W), jnp.float32),
        grid=(B,),
        in_specs=[
            pl.BlockSpec((1, C2, H, W), lambda b: (b, 0, 0, 0)),
            pl.BlockSpec((1, C1, h, w), lambda b: (b, 0, 0, 0)),
            pl.BlockSpec((H_up, h), lambda b: (0, 0)),
            pl.BlockSpec((w, W_up), lambda b: (0, 0)),
            pl.BlockSpec((3, (C1 + C2) * SEG, Cmid * W), lambda b: (0, 0, 0)),
            pl.BlockSpec((3, Cmid * SEG, Cout * W), lambda b: (0, 0, 0)),
        ],
        out_specs=pl.BlockSpec((1, Cout, H, W), lambda b: (b, 0, 0, 0)),
        scratch_shapes=[
            pltpu.VMEM((H + 2, (C1 + C2) * SEG), jnp.bfloat16),
            pltpu.VMEM((H + 2, Cmid * SEG), jnp.bfloat16),
        ],
        compiler_params=pltpu.CompilerParams(
            dimension_semantics=("parallel",),     # v7x: batch across the 2 TCs
            vmem_limit_bytes=32 * 1024 * 1024,
        ),
    )(x2_nchw, x1_nchw, uh, uwT, w1_packed, w2_packed)


# ----------------------------------------------------------------------------
# Reference (plain JAX/XLA) mirroring the same bf16-conv / f32-accum strategy
# ----------------------------------------------------------------------------
@jax.jit
def _up_forward_ref(x1_nchw, x2_nchw, w1_hwio, w2_hwio, uh, uwT):
    x1 = jnp.transpose(x1_nchw, (0, 2, 3, 1))
    x2 = jnp.transpose(x2_nchw, (0, 2, 3, 1))
    up = jnp.einsum("Hh,bhwc->bHwc", uh, x1)
    up = jnp.einsum("bHwc,wW->bHWc", up, uwT)
    dY = x2.shape[1] - up.shape[1]
    dX = x2.shape[2] - up.shape[2]
    up = jnp.pad(up, ((0, 0), (dY // 2, dY - dY // 2),
                      (dX // 2, dX - dX // 2), (0, 0)))
    x = jnp.concatenate([x2, up], axis=-1).astype(jnp.bfloat16)
    dn = ("NHWC", "HWIO", "NHWC")
    y = jax.lax.conv_general_dilated(
        x, w1_hwio.astype(jnp.bfloat16), (1, 1), "SAME",
        dimension_numbers=dn, preferred_element_type=jnp.float32)
    y = jnp.maximum(y, 0.0).astype(jnp.bfloat16)
    y = jax.lax.conv_general_dilated(
        y, w2_hwio.astype(jnp.bfloat16), (1, 1), "SAME",
        dimension_numbers=dn, preferred_element_type=jnp.float32)
    y = jnp.maximum(y, 0.0)
    return jnp.transpose(y, (0, 3, 1, 2))


if __name__ == "__main__":
    # Up(in_channels=8, out_channels=4, bilinear=True):
    #   x1: (B, in_channels//2=4, 8, 8), x2: (B, 4, 16, 16)
    #   after up+pad+concat: (B, 8, 16, 16) -> DoubleConv(8 -> mid 4 -> out 4)
    B = 2
    in_channels, out_channels = 8, 4
    mid_channels = in_channels // 2

    key = jax.random.PRNGKey(0)
    k1, k2, k3, k4 = jax.random.split(key, 4)

    x1 = jax.random.normal(k1, (B, in_channels // 2, 8, 8), jnp.float32)     # NCHW
    x2 = jax.random.normal(k2, (B, in_channels // 2, 16, 16), jnp.float32)   # NCHW

    # Synthetic conv weights stored HWIO (3, 3, Cin, Cout), no bias.
    w1 = 0.1 * jax.random.normal(k3, (3, 3, in_channels, mid_channels), jnp.float32)
    w2 = 0.1 * jax.random.normal(k4, (3, 3, mid_channels, out_channels), jnp.float32)

    # One-time (module init) packing: block-Toeplitz weights + upsample matrices.
    uh, uwT, w1p, w2p = make_up_params(w1, w2, h=8, w=8, H=16, W=16)

    out = jax.block_until_ready(up_forward(x1, x2, uh, uwT, w1p, w2p))
    assert out.shape == (B, out_channels, 16, 16), out.shape

    ref = jax.block_until_ready(_up_forward_ref(x1, x2, w1, w2, uh, uwT))
    max_err = float(jnp.max(jnp.abs(out - ref)))
    assert jnp.allclose(out, ref, atol=2e-2, rtol=2e-2), f"mismatch, max_err={max_err}"

    print("KERNEL_OK")
</pallas_src>

<mosaic_0001>
module attributes {stable_mosaic.version = 11 : i64} {
  func.func @kernel(%arg0: i32, %arg1: memref<1x4x16x16xf32, #tpu.memory_space<vmem>>, %arg2: memref<1x4x8x8xf32, #tpu.memory_space<vmem>>, %arg3: memref<16x8xf32, #tpu.memory_space<vmem>>, %arg4: memref<8x16xf32, #tpu.memory_space<vmem>>, %arg5: memref<3x144x64xbf16, #tpu.memory_space<vmem>>, %arg6: memref<3x72x64xbf16, #tpu.memory_space<vmem>>, %arg7: memref<1x4x16x16xf32, #tpu.memory_space<vmem>>, %arg8: memref<18x144xbf16, #tpu.memory_space<vmem>>, %arg9: memref<18x72xbf16, #tpu.memory_space<vmem>>) attributes {dimension_semantics = [#tpu.dimension_semantics<parallel>], iteration_bounds = array<i64: 2>, scalar_prefetch = 0 : i64, scratch_operands = 2 : i64, tpu.core_type = #tpu.core_type<tc>, window_params = [{transform_indices = @transform_0, window_bounds = array<i64: 1, 4, 16, 16>}, {transform_indices = @transform_1, window_bounds = array<i64: 1, 4, 8, 8>}, {pipeline_mode = #tpu.pipeline_mode<synchronous>, transform_indices = @transform_2, window_bounds = array<i64: 16, 8>}, {pipeline_mode = #tpu.pipeline_mode<synchronous>, transform_indices = @transform_3, window_bounds = array<i64: 8, 16>}, {pipeline_mode = #tpu.pipeline_mode<synchronous>, transform_indices = @transform_4, window_bounds = array<i64: 3, 144, 64>}, {pipeline_mode = #tpu.pipeline_mode<synchronous>, transform_indices = @transform_5, window_bounds = array<i64: 3, 72, 64>}, {transform_indices = @transform_6, window_bounds = array<i64: 1, 4, 16, 16>}]} {
    %cst = arith.constant 0.000000e+00 : bf16
    %0 = vector.broadcast %cst : bf16 to vector<18x144xbf16>
    %c0 = arith.constant 0 : index
    %c0_0 = arith.constant 0 : index
    %1 = vector.load %arg8[%c0, %c0_0] : memref<18x144xbf16, #tpu.memory_space<vmem>>, vector<18x144xbf16>
    tpu.vector_store %arg8[%c0, %c0_0], %0 {strides = array<i32>} : memref<18x144xbf16, #tpu.memory_space<vmem>>, vector<18x144xbf16>,
    %cst_1 = arith.constant 0.000000e+00 : bf16
    %2 = vector.broadcast %cst_1 : bf16 to vector<18x72xbf16>
    %c0_2 = arith.constant 0 : index
    %c0_3 = arith.constant 0 : index
    %3 = vector.load %arg9[%c0_2, %c0_3] : memref<18x72xbf16, #tpu.memory_space<vmem>>, vector<18x72xbf16>
    tpu.vector_store %arg9[%c0_2, %c0_3], %2 {strides = array<i32>} : memref<18x72xbf16, #tpu.memory_space<vmem>>, vector<18x72xbf16>,
    %c0_4 = arith.constant 0 : index
    %c0_5 = arith.constant 0 : index
    %c0_6 = arith.constant 0 : index
    %c0_7 = arith.constant 0 : index
    %4 = vector.load %arg1[%c0_4, %c0_5, %c0_6, %c0_7] : memref<1x4x16x16xf32, #tpu.memory_space<vmem>>, vector<1x1x16x16xf32>
    %5 = vector.shape_cast %4 : vector<1x1x16x16xf32> to vector<16x16xf32>
    %6 = arith.truncf %5 : vector<16x16xf32> to vector<16x16xbf16>
    %c1 = arith.constant 1 : index
    %c1_8 = arith.constant 1 : index
    %7 = vector.load %arg8[%c1, %c1_8] : memref<18x144xbf16, #tpu.memory_space<vmem>>, vector<16x16xbf16>
    tpu.vector_store %arg8[%c1, %c1_8], %6 {strides = array<i32>} : memref<18x144xbf16, #tpu.memory_space<vmem>>, vector<16x16xbf16>,
    %c0_9 = arith.constant 0 : index
    %c1_10 = arith.constant 1 : index
    %c0_11 = arith.constant 0 : index
    %c0_12 = arith.constant 0 : index
    %8 = vector.load %arg1[%c0_9, %c1_10, %c0_11, %c0_12] : memref<1x4x16x16xf32, #tpu.memory_space<vmem>>, vector<1x1x16x16xf32>
    %9 = vector.shape_cast %8 : vector<1x1x16x16xf32> to vector<16x16xf32>
    %10 = arith.truncf %9 : vector<16x16xf32> to vector<16x16xbf16>
    %c1_13 = arith.constant 1 : index
    %c19 = arith.constant 19 : index
    %11 = vector.load %arg8[%c1_13, %c19] : memref<18x144xbf16, #tpu.memory_space<vmem>>, vector<16x16xbf16>
    tpu.vector_store %arg8[%c1_13, %c19], %10 {strides = array<i32>} : memref<18x144xbf16, #tpu.memory_space<vmem>>, vector<16x16xbf16>,
    %c0_14 = arith.constant 0 : index
    %c2 = arith.constant 2 : index
    %c0_15 = arith.constant 0 : index
    %c0_16 = arith.constant 0 : index
    %12 = vector.load %arg1[%c0_14, %c2, %c0_15, %c0_16] : memref<1x4x16x16xf32, #tpu.memory_space<vmem>>, vector<1x1x16x16xf32>
    %13 = vector.shape_cast %12 : vector<1x1x16x16xf32> to vector<16x16xf32>
    %14 = arith.truncf %13 : vector<16x16xf32> to vector<16x16xbf16>
    %c1_17 = arith.constant 1 : index
    %c37 = arith.constant 37 : index
    %15 = vector.load %arg8[%c1_17, %c37] : memref<18x144xbf16, #tpu.memory_space<vmem>>, vector<16x16xbf16>
    tpu.vector_store %arg8[%c1_17, %c37], %14 {strides = array<i32>} : memref<18x144xbf16, #tpu.memory_space<vmem>>, vector<16x16xbf16>,
    %c0_18 = arith.constant 0 : index
    %c3 = arith.constant 3 : index
    %c0_19 = arith.constant 0 : index
    %c0_20 = arith.constant 0 : index
    %16 = vector.load %arg1[%c0_18, %c3, %c0_19, %c0_20] : memref<1x4x16x16xf32, #tpu.memory_space<vmem>>, vector<1x1x16x16xf32>
    %17 = vector.shape_cast %16 : vector<1x1x16x16xf32> to vector<16x16xf32>
    %18 = arith.truncf %17 : vector<16x16xf32> to vector<16x16xbf16>
    %c1_21 = arith.constant 1 : index
    %c55 = arith.constant 55 : index
    %19 = vector.load %arg8[%c1_21, %c55] : memref<18x144xbf16, #tpu.memory_space<vmem>>, vector<16x16xbf16>
    tpu.vector_store %arg8[%c1_21, %c55], %18 {strides = array<i32>} : memref<18x144xbf16, #tpu.memory_space<vmem>>, vector<16x16xbf16>,
    %c0_22 = arith.constant 0 : index
    %c0_23 = arith.constant 0 : index
    %20 = vector.load %arg3[%c0_22, %c0_23] : memref<16x8xf32, #tpu.memory_space<vmem>>, vector<16x8xf32>
    %c0_24 = arith.constant 0 : index
    %c0_25 = arith.constant 0 : index
    %21 = vector.load %arg4[%c0_24, %c0_25] : memref<8x16xf32, #tpu.memory_space<vmem>>, vector<8x16xf32>
    %c0_26 = arith.constant 0 : index
    %c0_27 = arith.constant 0 : index
    %c0_28 = arith.constant 0 : index
    %c0_29 = arith.constant 0 : index
    %22 = vector.load %arg2[%c0_26, %c0_27, %c0_28, %c0_29] : memref<1x4x8x8xf32, #tpu.memory_space<vmem>>, vector<1x1x8x8xf32>
    %23 = vector.shape_cast %22 : vector<1x1x8x8xf32> to vector<8x8xf32>
    %cst_30 = arith.constant dense<0.000000e+00> : vector<16x8xf32>
    %24 = tpu.matmul %20, %23, %cst_30 {dimension_numbers = #tpu.dot_dimension_numbers<[1], [0], [0], [1], [0, 0, 1, 1], [], []>} : vector<16x8xf32>, vector<8x8xf32>, vector<16x8xf32> -> vector<16x8xf32>
    %cst_31 = arith.constant dense<0.000000e+00> : vector<16x16xf32>
    %25 = tpu.matmul %24, %21, %cst_31 {dimension_numbers = #tpu.dot_dimension_numbers<[1], [0], [0], [1], [0, 0, 1, 1], [], []>} : vector<16x8xf32>, vector<8x16xf32>, vector<16x16xf32> -> vector<16x16xf32>
    %26 = arith.truncf %25 : vector<16x16xf32> to vector<16x16xbf16>
    %c1_32 = arith.constant 1 : index
    %c73 = arith.constant 73 : index
    %27 = vector.load %arg8[%c1_32, %c73] : memref<18x144xbf16, #tpu.memory_space<vmem>>, vector<16x16xbf16>
    tpu.vector_store %arg8[%c1_32, %c73], %26 {strides = array<i32>} : memref<18x144xbf16, #tpu.memory_space<vmem>>, vector<16x16xbf16>,
    %c0_33 = arith.constant 0 : index
    %c1_34 = arith.constant 1 : index
    %c0_35 = arith.constant 0 : index
    %c0_36 = arith.constant 0 : index
    %28 = vector.load %arg2[%c0_33, %c1_34, %c0_35, %c0_36] : memref<1x4x8x8xf32, #tpu.memory_space<vmem>>, vector<1x1x8x8xf32>
    %29 = vector.shape_cast %28 : vector<1x1x8x8xf32> to vector<8x8xf32>
    %cst_37 = arith.constant dense<0.000000e+00> : vector<16x8xf32>
    %30 = tpu.matmul %20, %29, %cst_37 {dimension_numbers = #tpu.dot_dimension_numbers<[1], [0], [0], [1], [0, 0, 1, 1], [], []>} : vector<16x8xf32>, vector<8x8xf32>, vector<16x8xf32> -> vector<16x8xf32>
    %cst_38 = arith.constant dense<0.000000e+00> : vector<16x16xf32>
    %31 = tpu.matmul %30, %21, %cst_38 {dimension_numbers = #tpu.dot_dimension_numbers<[1], [0], [0], [1], [0, 0, 1, 1], [], []>} : vector<16x8xf32>, vector<8x16xf32>, vector<16x16xf32> -> vector<16x16xf32>
    %32 = arith.truncf %31 : vector<16x16xf32> to vector<16x16xbf16>
    %c1_39 = arith.constant 1 : index
    %c91 = arith.constant 91 : index
    %33 = vector.load %arg8[%c1_39, %c91] : memref<18x144xbf16, #tpu.memory_space<vmem>>, vector<16x16xbf16>
    tpu.vector_store %arg8[%c1_39, %c91], %32 {strides = array<i32>} : memref<18x144xbf16, #tpu.memory_space<vmem>>, vector<16x16xbf16>,
    %c0_40 = arith.constant 0 : index
    %c2_41 = arith.constant 2 : index
    %c0_42 = arith.constant 0 : index
    %c0_43 = arith.constant 0 : index
    %34 = vector.load %arg2[%c0_40, %c2_41, %c0_42, %c0_43] : memref<1x4x8x8xf32, #tpu.memory_space<vmem>>, vector<1x1x8x8xf32>
    %35 = vector.shape_cast %34 : vector<1x1x8x8xf32> to vector<8x8xf32>
    %cst_44 = arith.constant dense<0.000000e+00> : vector<16x8xf32>
    %36 = tpu.matmul %20, %35, %cst_44 {dimension_numbers = #tpu.dot_dimension_numbers<[1], [0], [0], [1], [0, 0, 1, 1], [], []>} : vector<16x8xf32>, vector<8x8xf32>, vector<16x8xf32> -> vector<16x8xf32>
    %cst_45 = arith.constant dense<0.000000e+00> : vector<16x16xf32>
    %37 = tpu.matmul %36, %21, %cst_45 {dimension_numbers = #tpu.dot_dimension_numbers<[1], [0], [0], [1], [0, 0, 1, 1], [], []>} : vector<16x8xf32>, vector<8x16xf32>, vector<16x16xf32> -> vector<16x16xf32>
    %38 = arith.truncf %37 : vector<16x16xf32> to vector<16x16xbf16>
    %c1_46 = arith.constant 1 : index
    %c109 = arith.constant 109 : index
    %39 = vector.load %arg8[%c1_46, %c109] : memref<18x144xbf16, #tpu.memory_space<vmem>>, vector<16x16xbf16>
    tpu.vector_store %arg8[%c1_46, %c109], %38 {strides = array<i32>} : memref<18x144xbf16, #tpu.memory_space<vmem>>, vector<16x16xbf16>,
    %c0_47 = arith.constant 0 : index
    %c3_48 = arith.constant 3 : index
    %c0_49 = arith.constant 0 : index
    %c0_50 = arith.constant 0 : index
    %40 = vector.load %arg2[%c0_47, %c3_48, %c0_49, %c0_50] : memref<1x4x8x8xf32, #tpu.memory_space<vmem>>, vector<1x1x8x8xf32>
    %41 = vector.shape_cast %40 : vector<1x1x8x8xf32> to vector<8x8xf32>
    %cst_51 = arith.constant dense<0.000000e+00> : vector<16x8xf32>
    %42 = tpu.matmul %20, %41, %cst_51 {dimension_numbers = #tpu.dot_dimension_numbers<[1], [0], [0], [1], [0, 0, 1, 1], [], []>} : vector<16x8xf32>, vector<8x8xf32>, vector<16x8xf32> -> vector<16x8xf32>
    %cst_52 = arith.constant dense<0.000000e+00> : vector<16x16xf32>
    %43 = tpu.matmul %42, %21, %cst_52 {dimension_numbers = #tpu.dot_dimension_numbers<[1], [0], [0], [1], [0, 0, 1, 1], [], []>} : vector<16x8xf32>, vector<8x16xf32>, vector<16x16xf32> -> vector<16x16xf32>
    %44 = arith.truncf %43 : vector<16x16xf32> to vector<16x16xbf16>
    %c1_53 = arith.constant 1 : index
    %c127 = arith.constant 127 : index
    %45 = vector.load %arg8[%c1_53, %c127] : memref<18x144xbf16, #tpu.memory_space<vmem>>, vector<16x16xbf16>
    tpu.vector_store %arg8[%c1_53, %c127], %44 {strides = array<i32>} : memref<18x144xbf16, #tpu.memory_space<vmem>>, vector<16x16xbf16>,
    %cst_54 = arith.constant 0.000000e+00 : f32
    %46 = vector.broadcast %cst_54 : f32 to vector<16x64xf32>
    %c0_55 = arith.constant 0 : index
    %c0_56 = arith.constant 0 : index
    %47 = vector.load %arg8[%c0_55, %c0_56] : memref<18x144xbf16, #tpu.memory_space<vmem>>, vector<16x144xbf16>
    %c0_57 = arith.constant 0 : index
    %c0_58 = arith.constant 0 : index
    %c0_59 = arith.constant 0 : index
    %48 = vector.load %arg5[%c0_57, %c0_58, %c0_59] : memref<3x144x64xbf16, #tpu.memory_space<vmem>>, vector<1x144x64xbf16>
    %49 = vector.shape_cast %48 : vector<1x144x64xbf16> to vector<144x64xbf16>
    %cst_60 = arith.constant dense<0.000000e+00> : vector<16x64xf32>
    %50 = tpu.matmul %47, %49, %cst_60 {dimension_numbers = #tpu.dot_dimension_numbers<[1], [0], [0], [1], [0, 0, 1, 1], [], []>} : vector<16x144xbf16>, vector<144x64xbf16>, vector<16x64xf32> -> vector<16x64xf32>
    %51 = arith.addf %46, %50 : vector<16x64xf32>
    %c1_61 = arith.constant 1 : index
    %c0_62 = arith.constant 0 : index
    %52 = vector.load %arg8[%c1_61, %c0_62] : memref<18x144xbf16, #tpu.memory_space<vmem>>, vector<16x144xbf16>
    %c1_63 = arith.constant 1 : index
    %c0_64 = arith.constant 0 : index
    %c0_65 = arith.constant 0 : index
    %53 = vector.load %arg5[%c1_63, %c0_64, %c0_65] : memref<3x144x64xbf16, #tpu.memory_space<vmem>>, vector<1x144x64xbf16>
    %54 = vector.shape_cast %53 : vector<1x144x64xbf16> to vector<144x64xbf16>
    %cst_66 = arith.constant dense<0.000000e+00> : vector<16x64xf32>
    %55 = tpu.matmul %52, %54, %cst_66 {dimension_numbers = #tpu.dot_dimension_numbers<[1], [0], [0], [1], [0, 0, 1, 1], [], []>} : vector<16x144xbf16>, vector<144x64xbf16>, vector<16x64xf32> -> vector<16x64xf32>
    %56 = arith.addf %51, %55 : vector<16x64xf32>
    %c2_67 = arith.constant 2 : index
    %c0_68 = arith.constant 0 : index
    %57 = vector.load %arg8[%c2_67, %c0_68] : memref<18x144xbf16, #tpu.memory_space<vmem>>, vector<16x144xbf16>
    %c2_69 = arith.constant 2 : index
    %c0_70 = arith.constant 0 : index
    %c0_71 = arith.constant 0 : index
    %58 = vector.load %arg5[%c2_69, %c0_70, %c0_71] : memref<3x144x64xbf16, #tpu.memory_space<vmem>>, vector<1x144x64xbf16>
    %59 = vector.shape_cast %58 : vector<1x144x64xbf16> to vector<144x64xbf16>
    %cst_72 = arith.constant dense<0.000000e+00> : vector<16x64xf32>
    %60 = tpu.matmul %57, %59, %cst_72 {dimension_numbers = #tpu.dot_dimension_numbers<[1], [0], [0], [1], [0, 0, 1, 1], [], []>} : vector<16x144xbf16>, vector<144x64xbf16>, vector<16x64xf32> -> vector<16x64xf32>
    %61 = arith.addf %56, %60 : vector<16x64xf32>
    %cst_73 = arith.constant 0.000000e+00 : f32
    %62 = vector.broadcast %cst_73 : f32 to vector<16x64xf32>
    %63 = arith.maximumf %61, %62 : vector<16x64xf32>
    %64 = vector.extract_strided_slice %63 {offsets = [0, 0], sizes = [16, 16], strides = [1, 1]} : vector<16x64xf32> to vector<16x16xf32>
    %65 = arith.truncf %64 : vector<16x16xf32> to vector<16x16xbf16>
    %c1_74 = arith.constant 1 : index
    %c1_75 = arith.constant 1 : index
    %66 = vector.load %arg9[%c1_74, %c1_75] : memref<18x72xbf16, #tpu.memory_space<vmem>>, vector<16x16xbf16>
    tpu.vector_store %arg9[%c1_74, %c1_75], %65 {strides = array<i32>} : memref<18x72xbf16, #tpu.memory_space<vmem>>, vector<16x16xbf16>,
    %67 = vector.extract_strided_slice %63 {offsets = [0, 16], sizes = [16, 16], strides = [1, 1]} : vector<16x64xf32> to vector<16x16xf32>
    %68 = arith.truncf %67 : vector<16x16xf32> to vector<16x16xbf16>
    %c1_76 = arith.constant 1 : index
    %c19_77 = arith.constant 19 : index
    %69 = vector.load %arg9[%c1_76, %c19_77] : memref<18x72xbf16, #tpu.memory_space<vmem>>, vector<16x16xbf16>
    tpu.vector_store %arg9[%c1_76, %c19_77], %68 {strides = array<i32>} : memref<18x72xbf16, #tpu.memory_space<vmem>>, vector<16x16xbf16>,
    %70 = vector.extract_strided_slice %63 {offsets = [0, 32], sizes = [16, 16], strides = [1, 1]} : vector<16x64xf32> to vector<16x16xf32>
    %71 = arith.truncf %70 : vector<16x16xf32> to vector<16x16xbf16>
    %c1_78 = arith.constant 1 : index
    %c37_79 = arith.constant 37 : index
    %72 = vector.load %arg9[%c1_78, %c37_79] : memref<18x72xbf16, #tpu.memory_space<vmem>>, vector<16x16xbf16>
    tpu.vector_store %arg9[%c1_78, %c37_79], %71 {strides = array<i32>} : memref<18x72xbf16, #tpu.memory_space<vmem>>, vector<16x16xbf16>,
    %73 = vector.extract_strided_slice %63 {offsets = [0, 48], sizes = [16, 16], strides = [1, 1]} : vector<16x64xf32> to vector<16x16xf32>
    %74 = arith.truncf %73 : vector<16x16xf32> to vector<16x16xbf16>
    %c1_80 = arith.constant 1 : index
    %c55_81 = arith.constant 55 : index
    %75 = vector.load %arg9[%c1_80, %c55_81] : memref<18x72xbf16, #tpu.memory_space<vmem>>, vector<16x16xbf16>
    tpu.vector_store %arg9[%c1_80, %c55_81], %74 {strides = array<i32>} : memref<18x72xbf16, #tpu.memory_space<vmem>>, vector<16x16xbf16>,
    %cst_82 = arith.constant 0.000000e+00 : f32
    %76 = vector.broadcast %cst_82 : f32 to vector<16x64xf32>
    %c0_83 = arith.constant 0 : index
    %c0_84 = arith.constant 0 : index
    %77 = vector.load %arg9[%c0_83, %c0_84] : memref<18x72xbf16, #tpu.memory_space<vmem>>, vector<16x72xbf16>
    %c0_85 = arith.constant 0 : index
    %c0_86 = arith.constant 0 : index
    %c0_87 = arith.constant 0 : index
    %78 = vector.load %arg6[%c0_85, %c0_86, %c0_87] : memref<3x72x64xbf16, #tpu.memory_space<vmem>>, vector<1x72x64xbf16>
    %79 = vector.shape_cast %78 : vector<1x72x64xbf16> to vector<72x64xbf16>
    %cst_88 = arith.constant dense<0.000000e+00> : vector<16x64xf32>
    %80 = tpu.matmul %77, %79, %cst_88 {dimension_numbers = #tpu.dot_dimension_numbers<[1], [0], [0], [1], [0, 0, 1, 1], [], []>} : vector<16x72xbf16>, vector<72x64xbf16>, vector<16x64xf32> -> vector<16x64xf32>
    %81 = arith.addf %76, %80 : vector<16x64xf32>
    %c1_89 = arith.constant 1 : index
    %c0_90 = arith.constant 0 : index
    %82 = vector.load %arg9[%c1_89, %c0_90] : memref<18x72xbf16, #tpu.memory_space<vmem>>, vector<16x72xbf16>
    %c1_91 = arith.constant 1 : index
    %c0_92 = arith.constant 0 : index
    %c0_93 = arith.constant 0 : index
    %83 = vector.load %arg6[%c1_91, %c0_92, %c0_93] : memref<3x72x64xbf16, #tpu.memory_space<vmem>>, vector<1x72x64xbf16>
    %84 = vector.shape_cast %83 : vector<1x72x64xbf16> to vector<72x64xbf16>
    %cst_94 = arith.constant dense<0.000000e+00> : vector<16x64xf32>
    %85 = tpu.matmul %82, %84, %cst_94 {dimension_numbers = #tpu.dot_dimension_numbers<[1], [0], [0], [1], [0, 0, 1, 1], [], []>} : vector<16x72xbf16>, vector<72x64xbf16>, vector<16x64xf32> -> vector<16x64xf32>
    %86 = arith.addf %81, %85 : vector<16x64xf32>
    %c2_95 = arith.constant 2 : index
    %c0_96 = arith.constant 0 : index
    %87 = vector.load %arg9[%c2_95, %c0_96] : memref<18x72xbf16, #tpu.memory_space<vmem>>, vector<16x72xbf16>
    %c2_97 = arith.constant 2 : index
    %c0_98 = arith.constant 0 : index
    %c0_99 = arith.constant 0 : index
    %88 = vector.load %arg6[%c2_97, %c0_98, %c0_99] : memref<3x72x64xbf16, #tpu.memory_space<vmem>>, vector<1x72x64xbf16>
    %89 = vector.shape_cast %88 : vector<1x72x64xbf16> to vector<72x64xbf16>
    %cst_100 = arith.constant dense<0.000000e+00> : vector<16x64xf32>
    %90 = tpu.matmul %87, %89, %cst_100 {dimension_numbers = #tpu.dot_dimension_numbers<[1], [0], [0], [1], [0, 0, 1, 1], [], []>} : vector<16x72xbf16>, vector<72x64xbf16>, vector<16x64xf32> -> vector<16x64xf32>
    %91 = arith.addf %86, %90 : vector<16x64xf32>
    %cst_101 = arith.constant 0.000000e+00 : f32
    %92 = vector.broadcast %cst_101 : f32 to vector<16x64xf32>
    %93 = arith.maximumf %91, %92 : vector<16x64xf32>
    %94 = vector.extract_strided_slice %93 {offsets = [0, 0], sizes = [16, 16], strides = [1, 1]} : vector<16x64xf32> to vector<16x16xf32>
    %c0_102 = arith.constant 0 : index
    %c0_103 = arith.constant 0 : index
    %c0_104 = arith.constant 0 : index
    %c0_105 = arith.constant 0 : index
    %95 = vector.load %arg7[%c0_102, %c0_103, %c0_104, %c0_105] : memref<1x4x16x16xf32, #tpu.memory_space<vmem>>, vector<1x1x16x16xf32>
    %96 = vector.shape_cast %95 : vector<1x1x16x16xf32> to vector<16x16xf32>
    %97 = vector.shape_cast %94 : vector<16x16xf32> to vector<1x1x16x16xf32>
    tpu.vector_store %arg7[%c0_102, %c0_103, %c0_104, %c0_105], %97 {strides = array<i32>} : memref<1x4x16x16xf32, #tpu.memory_space<vmem>>, vector<1x1x16x16xf32>,
    %98 = vector.extract_strided_slice %93 {offsets = [0, 16], sizes = [16, 16], strides = [1, 1]} : vector<16x64xf32> to vector<16x16xf32>
    %c0_106 = arith.constant 0 : index
    %c1_107 = arith.constant 1 : index
    %c0_108 = arith.constant 0 : index
    %c0_109 = arith.constant 0 : index
    %99 = vector.load %arg7[%c0_106, %c1_107, %c0_108, %c0_109] : memref<1x4x16x16xf32, #tpu.memory_space<vmem>>, vector<1x1x16x16xf32>
    %100 = vector.shape_cast %99 : vector<1x1x16x16xf32> to vector<16x16xf32>
    %101 = vector.shape_cast %98 : vector<16x16xf32> to vector<1x1x16x16xf32>
    tpu.vector_store %arg7[%c0_106, %c1_107, %c0_108, %c0_109], %101 {strides = array<i32>} : memref<1x4x16x16xf32, #tpu.memory_space<vmem>>, vector<1x1x16x16xf32>,
    %102 = vector.extract_strided_slice %93 {offsets = [0, 32], sizes = [16, 16], strides = [1, 1]} : vector<16x64xf32> to vector<16x16xf32>
    %c0_110 = arith.constant 0 : index
    %c2_111 = arith.constant 2 : index
    %c0_112 = arith.constant 0 : index
    %c0_113 = arith.constant 0 : index
    %103 = vector.load %arg7[%c0_110, %c2_111, %c0_112, %c0_113] : memref<1x4x16x16xf32, #tpu.memory_space<vmem>>, vector<1x1x16x16xf32>
    %104 = vector.shape_cast %103 : vector<1x1x16x16xf32> to vector<16x16xf32>
    %105 = vector.shape_cast %102 : vector<16x16xf32> to vector<1x1x16x16xf32>
    tpu.vector_store %arg7[%c0_110, %c2_111, %c0_112, %c0_113], %105 {strides = array<i32>} : memref<1x4x16x16xf32, #tpu.memory_space<vmem>>, vector<1x1x16x16xf32>,
    %106 = vector.extract_strided_slice %93 {offsets = [0, 48], sizes = [16, 16], strides = [1, 1]} : vector<16x64xf32> to vector<16x16xf32>
    %c0_114 = arith.constant 0 : index
    %c3_115 = arith.constant 3 : index
    %c0_116 = arith.constant 0 : index
    %c0_117 = arith.constant 0 : index
    %107 = vector.load %arg7[%c0_114, %c3_115, %c0_116, %c0_117] : memref<1x4x16x16xf32, #tpu.memory_space<vmem>>, vector<1x1x16x16xf32>
    %108 = vector.shape_cast %107 : vector<1x1x16x16xf32> to vector<16x16xf32>
    %109 = vector.shape_cast %106 : vector<16x16xf32> to vector<1x1x16x16xf32>
    tpu.vector_store %arg7[%c0_114, %c3_115, %c0_116, %c0_117], %109 {strides = array<i32>} : memref<1x4x16x16xf32, #tpu.memory_space<vmem>>, vector<1x1x16x16xf32>,
    return
  }
  func.func @transform_0(%arg0: i32) -> (i32, i32, i32, i32) {
    %c0_i32 = arith.constant 0 : i32
    %c0_i32_0 = arith.constant 0 : i32
    %c0_i32_1 = arith.constant 0 : i32
    %c0_i32_2 = arith.constant 0 : i32
    return %arg0, %c0_i32, %c0_i32_0, %c0_i32_1 : i32, i32, i32, i32
  }
  func.func @transform_1(%arg0: i32) -> (i32, i32, i32, i32) {
    %c0_i32 = arith.constant 0 : i32
    %c0_i32_0 = arith.constant 0 : i32
    %c0_i32_1 = arith.constant 0 : i32
    %c0_i32_2 = arith.constant 0 : i32
    return %arg0, %c0_i32, %c0_i32_0, %c0_i32_1 : i32, i32, i32, i32
  }
  func.func @transform_2(%arg0: i32) -> (i32, i32) {
    %c0_i32 = arith.constant 0 : i32
    %c0_i32_0 = arith.constant 0 : i32
    %c0_i32_1 = arith.constant 0 : i32
    return %c0_i32, %c0_i32_0 : i32, i32
  }
  func.func @transform_3(%arg0: i32) -> (i32, i32) {
    %c0_i32 = arith.constant 0 : i32
    %c0_i32_0 = arith.constant 0 : i32
    %c0_i32_1 = arith.constant 0 : i32
    return %c0_i32, %c0_i32_0 : i32, i32
  }
  func.func @transform_4(%arg0: i32) -> (i32, i32, i32) {
    %c0_i32 = arith.constant 0 : i32
    %c0_i32_0 = arith.constant 0 : i32
    %c0_i32_1 = arith.constant 0 : i32
    %c0_i32_2 = arith.constant 0 : i32
    return %c0_i32, %c0_i32_0, %c0_i32_1 : i32, i32, i32
  }
  func.func @transform_5(%arg0: i32) -> (i32, i32, i32) {
    %c0_i32 = arith.constant 0 : i32
    %c0_i32_0 = arith.constant 0 : i32
    %c0_i32_1 = arith.constant 0 : i32
    %c0_i32_2 = arith.constant 0 : i32
    return %c0_i32, %c0_i32_0, %c0_i32_1 : i32, i32, i32
  }
  func.func @transform_6(%arg0: i32) -> (i32, i32, i32, i32) {
    %c0_i32 = arith.constant 0 : i32
    %c0_i32_0 = arith.constant 0 : i32
    %c0_i32_1 = arith.constant 0 : i32
    %c0_i32_2 = arith.constant 0 : i32
    return %arg0, %c0_i32, %c0_i32_0, %c0_i32_1 : i32, i32, i32, i32
  }
}

</mosaic_0001>

<llo_original>
// kernel: up_forward.1
$region0: #{up_forward.1}
  #allocation0 [shape = 'u32[]', space=smem, size = 0x4, offset = 0x4, fixed_abs, tag = 'smem constant byte address 0x4 - core index']
  #allocation1 [shape = 'u32[144,128]{1,0:T(1,128)}', space=vmem, size = 0x12000, scoped, tag = 'internal scratch']
  #allocation2 [shape = 'bf16[18,144]{1,0:T(8,128)(2,1)}', space=vmem, size = 0x3000, scoped, tag = 'scratch operand']
  #allocation3 [shape = 'bf16[18,72]{1,0:T(8,128)(2,1)}', space=vmem, size = 0x1800, scoped, tag = 'scratch operand']
  %s0 = inlined_call_operand.vmem [shape: f32[2,4,16,16], index: 0, kind: input, shape index: {}]
  %s1 = inlined_call_operand.vmem [shape: f32[2,4,8,8], index: 1, kind: input, shape index: {}]
  %s2 = inlined_call_operand.vmem [shape: f32[16,8], index: 2, kind: input, shape index: {}]
  %s3 = inlined_call_operand.vmem [shape: f32[8,16], index: 3, kind: input, shape index: {}]
  %s4 = inlined_call_operand.vmem [shape: bf16[3,144,64], index: 4, kind: input, shape index: {}]
  %s5 = inlined_call_operand.vmem [shape: bf16[3,72,64], index: 5, kind: input, shape index: {}]
  %s6 = inlined_call_operand.hbm [shape: f32[2,4,16,16], index: 6, kind: output, shape index: {}]
  %s7 = sld [smem:[#allocation0]]
  $region57: #{up_forward.1} parent=0
    _
  %s9 = ssub.s32 1, %s7
  %s10 = scalar_select 0, %s9, %s7
  $region1: #{up_forward.1} parent=0
    #allocation4 [shape = 'u8[65536]{0}', space=vmem, size = 0x10000, scoped, tag = 'output window, operand 0']
    #allocation5 [shape = 's32[2]{0}', space=sflag, size = 0x8, scoped, tag = 'scoped memory for up_forward.1']
    %11 = vsyncpa [#allocation5], 0
    %s12 = scalar_lea.sflag [#allocation5], 1
    %13 = vsyncpa %s12, 0
    loop: start=0, step=1, limit=4
    $region2: #{up_forward.1} parent=1 // loop_pre_header
      _
    $region3: #{up_forward.1} parent=1 // loop_header
      %s15 = sphi 0, %s19
      %p16 = scmp.ge.s32.totalorder %s15, 4
      %s25 = sphi 0, %s27
      %s28 = sphi 0, %s25
      %s29 = sphi 0, %s28
      %s45 = sphi 0, %s29
      %s51 = sphi 0, %s53
      %s54 = sphi 0, %s51
      %s55 = sphi 0, %s54
      %s71 = sphi 0, %s55
      %s75 = sphi 0, %s75
      %s77 = sphi 0, %s75
      %s78 = sphi 0, %s77
      %s92 = sphi 0, %s78
      %s96 = sphi 0, %s96
      %s98 = sphi 0, %s96
      %s99 = sphi 0, %s98
      %s113 = sphi 0, %s99
      %s117 = sphi 0, %s117
      %s119 = sphi 0, %s117
      %s120 = sphi 0, %s119
      %s134 = sphi 0, %s120
      %s138 = sphi 0, %s138
      %s140 = sphi 0, %s138
      %s141 = sphi 0, %s140
      %s155 = sphi 0, %s141
      %s161 = sphi 0, %s163
      %s164 = sphi 0, %s161
      %s165 = sphi 0, %s164
      %s181 = sphi 0, %s165
    $region4: #{up_forward.1} parent=1 // loop_header_branch
      %18 = sbr.rel (%p16) target = $region8
    $region5: #{up_forward.1} parent=1 // loop_body
      %s20 = ssub.s32 %s15, 1
      %s21 = ssub.s32 %s15, 2
      %s22 = sadd.s32 %s15, 1
      %s23 = ssub.s32 %s15, %s22
      %p24 = scmp.eq.s32.totalorder %s23, 0
      %s26 = sadd.s32 %s25, 1
      %s27 = scalar_select %p24, %s25, %s26
      %p30 = pneg %p24
      %p31 = scmp.eq.s32.totalorder %s15, 1
      %p32 = por %p30, %p31
      %p33 = scmp.ne.s32.totalorder %s25, %s28
      %p34 = scmp.eq.s32.totalorder %s15, 0
      %p35 = por %p33, %p34
      %p36 = scmp.ne.s32.totalorder %s25, %s28
      %p37 = scmp.eq.s32.totalorder %s20, 1
      %p38 = por %p36, %p37
      %p39 = scmp.ne.s32.totalorder %s28, %s29
      %p40 = scmp.eq.s32.totalorder %s20, 0
      %p41 = por %p39, %p40
      %p42 = scmp.ne.s32.totalorder %s28, %s29
      %p43 = scmp.eq.s32.totalorder %s21, 1
      %p44 = por %p42, %p43
      %p46 = scmp.ne.s32.totalorder %s29, %s45
      %p47 = scmp.eq.s32.totalorder %s21, 0
      %p48 = por %p46, %p47
      %s49 = ssub.s32 %s15, %s22
      %p50 = scmp.eq.s32.totalorder %s49, 0
      %s52 = sadd.s32 %s51, 1
      %s53 = scalar_select %p50, %s51, %s52
      %p56 = pneg %p50
      %p57 = scmp.eq.s32.totalorder %s15, 1
      %p58 = por %p56, %p57
      %p59 = scmp.ne.s32.totalorder %s51, %s54
      %p60 = scmp.eq.s32.totalorder %s15, 0
      %p61 = por %p59, %p60
      %p62 = scmp.ne.s32.totalorder %s51, %s54
      %p63 = scmp.eq.s32.totalorder %s20, 1
      %p64 = por %p62, %p63
      %p65 = scmp.ne.s32.totalorder %s54, %s55
      %p66 = scmp.eq.s32.totalorder %s20, 0
      %p67 = por %p65, %p66
      %p68 = scmp.ne.s32.totalorder %s54, %s55
      %p69 = scmp.eq.s32.totalorder %s21, 1
      %p70 = por %p68, %p69
      %p72 = scmp.ne.s32.totalorder %s55, %s71
      %p73 = scmp.eq.s32.totalorder %s21, 0
      %p74 = por %p72, %p73
      %s76 = sadd.s32 %s75, 1
      %p79 = scmp.eq.s32.totalorder %s15, 1
      %p80 = scmp.ne.s32.totalorder %s75, %s77
      %p81 = scmp.eq.s32.totalorder %s15, 0
      %p82 = por %p80, %p81
      %p83 = scmp.ne.s32.totalorder %s75, %s77
      %p84 = scmp.eq.s32.totalorder %s20, 1
      %p85 = por %p83, %p84
      %p86 = scmp.ne.s32.totalorder %s77, %s78
      %p87 = scmp.eq.s32.totalorder %s20, 0
      %p88 = por %p86, %p87
      %p89 = scmp.ne.s32.totalorder %s77, %s78
      %p90 = scmp.eq.s32.totalorder %s21, 1
      %p91 = por %p89, %p90
      %p93 = scmp.ne.s32.totalorder %s78, %s92
      %p94 = scmp.eq.s32.totalorder %s21, 0
      %p95 = por %p93, %p94
      %s97 = sadd.s32 %s96, 1
      %p100 = scmp.eq.s32.totalorder %s15, 1
      %p101 = scmp.ne.s32.totalorder %s96, %s98
      %p102 = scmp.eq.s32.totalorder %s15, 0
      %p103 = por %p101, %p102
      %p104 = scmp.ne.s32.totalorder %s96, %s98
      %p105 = scmp.eq.s32.totalorder %s20, 1
      %p106 = por %p104, %p105
      %p107 = scmp.ne.s32.totalorder %s98, %s99
      %p108 = scmp.eq.s32.totalorder %s20, 0
      %p109 = por %p107, %p108
      %p110 = scmp.ne.s32.totalorder %s98, %s99
      %p111 = scmp.eq.s32.totalorder %s21, 1
      %p112 = por %p110, %p111
      %p114 = scmp.ne.s32.totalorder %s99, %s113
      %p115 = scmp.eq.s32.totalorder %s21, 0
      %p116 = por %p114, %p115
      %s118 = sadd.s32 %s117, 1
      %p121 = scmp.eq.s32.totalorder %s15, 1
      %p122 = scmp.ne.s32.totalorder %s117, %s119
      %p123 = scmp.eq.s32.totalorder %s15, 0
      %p124 = por %p122, %p123
      %p125 = scmp.ne.s32.totalorder %s117, %s119
      %p126 = scmp.eq.s32.totalorder %s20, 1
      %p127 = por %p125, %p126
      %p128 = scmp.ne.s32.totalorder %s119, %s120
      %p129 = scmp.eq.s32.totalorder %s20, 0
      %p130 = por %p128, %p129
      %p131 = scmp.ne.s32.totalorder %s119, %s120
      %p132 = scmp.eq.s32.totalorder %s21, 1
      %p133 = por %p131, %p132
      %p135 = scmp.ne.s32.totalorder %s120, %s134
      %p136 = scmp.eq.s32.totalorder %s21, 0
      %p137 = por %p135, %p136
      %s139 = sadd.s32 %s138, 1
      %p142 = scmp.eq.s32.totalorder %s15, 1
      %p143 = scmp.ne.s32.totalorder %s138, %s140
      %p144 = scmp.eq.s32.totalorder %s15, 0
      %p145 = por %p143, %p144
      %p146 = scmp.ne.s32.totalorder %s138, %s140
      %p147 = scmp.eq.s32.totalorder %s20, 1
      %p148 = por %p146, %p147
      %p149 = scmp.ne.s32.totalorder %s140, %s141
      %p150 = scmp.eq.s32.totalorder %s20, 0
      %p151 = por %p149, %p150
      %p152 = scmp.ne.s32.totalorder %s140, %s141
      %p153 = scmp.eq.s32.totalorder %s21, 1
      %p154 = por %p152, %p153
      %p156 = scmp.ne.s32.totalorder %s141, %s155
      %p157 = scmp.eq.s32.totalorder %s21, 0
      %p158 = por %p156, %p157
      %s159 = ssub.s32 %s15, %s22
      %p160 = scmp.eq.s32.totalorder %s159, 0
      %s162 = sadd.s32 %s161, 1
      %s163 = scalar_select %p160, %s161, %s162
      %p166 = pneg %p160
      %p167 = scmp.eq.s32.totalorder %s15, 1
      %p168 = por %p166, %p167
      %p169 = scmp.ne.s32.totalorder %s161, %s164
      %p170 = scmp.eq.s32.totalorder %s15, 0
      %p171 = por %p169, %p170
      %p172 = scmp.ne.s32.totalorder %s161, %s164
      %p173 = scmp.eq.s32.totalorder %s20, 1
      %p174 = por %p172, %p173
      %p175 = scmp.ne.s32.totalorder %s164, %s165
      %p176 = scmp.eq.s32.totalorder %s20, 0
      %p177 = por %p175, %p176
      %p178 = scmp.ne.s32.totalorder %s164, %s165
      %p179 = scmp.eq.s32.totalorder %s21, 1
      %p180 = por %p178, %p179
      %p182 = scmp.ne.s32.totalorder %s165, %s181
      %p183 = scmp.eq.s32.totalorder %s21, 0
      %p184 = por %p182, %p183
      %p185 = scmp.le.s32.totalorder 1, %s15
      %p186 = scmp.lt.s32.totalorder %s15, 3
      %p187 = pnand %p185, %p186
      %p188 = pneg %p187
      // Predicated region
      $region9: #{up_forward.1} parent=5 // pred_check
        _
      $region10: #{up_forward.1} parent=5 // pred_check_branch
        %190 = sbr.rel (%p187) target = $region12
      $region11: #{up_forward.1} parent=5 // pred_region
        %s191 = ssub.s32 %s15, 1
        // Predicated region
        $region13: #{up_forward.1} parent=11 // pred_check
          %p192 = pneg %p88
        $region14: #{up_forward.1} parent=11 // pred_check_branch
          %194 = sbr.rel (%p192) target = $region16
        $region15: #{up_forward.1} parent=11 // pred_region
          _
        $region16: #{up_forward.1} parent=11 // pred_fallthru
          _
        // Predicated region
        $region17: #{up_forward.1} parent=11 // pred_check
          %p195 = pneg %p109
        $region18: #{up_forward.1} parent=11 // pred_check_branch
          %197 = sbr.rel (%p195) target = $region20
        $region19: #{up_forward.1} parent=11 // pred_region
          _
        $region20: #{up_forward.1} parent=11 // pred_fallthru
          _
        // Predicated region
        $region21: #{up_forward.1} parent=11 // pred_check
          %p198 = pneg %p130
        $region22: #{up_forward.1} parent=11 // pred_check_branch
          %200 = sbr.rel (%p198) target = $region24
        $region23: #{up_forward.1} parent=11 // pred_region
          _
        $region24: #{up_forward.1} parent=11 // pred_fallthru
          _
        // Predicated region
        $region25: #{up_forward.1} parent=11 // pred_check
          %p201 = pneg %p151
        $region26: #{up_forward.1} parent=11 // pred_check_branch
          %203 = sbr.rel (%p201) target = $region28
        $region27: #{up_forward.1} parent=11 // pred_region
          _
        $region28: #{up_forward.1} parent=11 // pred_fallthru
          _
      $region12: #{up_forward.1} parent=5 // pred_fallthru
        _
      %p204 = scmp.lt.s32.totalorder %s15, 2
      // Predicated region
      $region29: #{up_forward.1} parent=5 // pred_check
        %p205 = pneg %p204
      $region30: #{up_forward.1} parent=5 // pred_check_branch
        %207 = sbr.rel (%p205) target = $region32
      $region31: #{up_forward.1} parent=5 // pred_region
        // Predicated region
        $region33: #{up_forward.1} parent=31 // pred_check
          %p208 = pneg %p35
        $region34: #{up_forward.1} parent=31 // pred_check_branch
          %210 = sbr.rel (%p208) target = $region36
        $region35: #{up_forward.1} parent=31 // pred_region
          %p211 = scmp.lt.s32.totalorder %s15, 1
          %s212 = scalar_select %p211, %s15, 1
          %s213 = smul.addr %s212, 8
          %s214 = smul.addr %s213, 8
          %s215 = scalar_lea.vmem %s0, %s214
        $region36: #{up_forward.1} parent=31 // pred_fallthru
          _
        // Predicated region
        $region37: #{up_forward.1} parent=31 // pred_check
          %p216 = pneg %p61
        $region38: #{up_forward.1} parent=31 // pred_check_branch
          %218 = sbr.rel (%p216) target = $region40
        $region39: #{up_forward.1} parent=31 // pred_region
          %p219 = scmp.lt.s32.totalorder %s15, 1
          %s220 = scalar_select %p219, %s15, 1
          %s221 = smul.addr %s220, 4
          %s222 = smul.addr %s221, 8
          %s223 = scalar_lea.vmem %s1, %s222
        $region40: #{up_forward.1} parent=31 // pred_fallthru
          _
      $region32: #{up_forward.1} parent=5 // pred_fallthru
        _
      %p224 = scmp.le.s32.totalorder 1, %s15
      %p225 = scmp.lt.s32.totalorder %s15, 3
      %p226 = pnand %p224, %p225
      %p227 = pneg %p226
      // Predicated region
      $region41: #{up_forward.1} parent=5 // pred_check
        _
      $region42: #{up_forward.1} parent=5 // pred_check_branch
        %229 = sbr.rel (%p226) target = $region44
      $region43: #{up_forward.1} parent=5 // pred_region
        %s230 = ssub.s32 %s15, 1
        %p231 = scmp.lt.s32.totalorder %s20, 1
        %s232 = scalar_select %p231, %s20, 1
        %s233 = smul.addr %s232, 8
        %s234 = smul.addr %s233, 8
        %s235 = scalar_lea.vmem %s0, %s234
        %p236 = pneg %p41
        %p237 = pneg %p38
        %p238 = scmp.lt.s32.totalorder %s20, 1
        %s239 = scalar_select %p238, %s20, 1
        %s240 = smul.addr %s239, 4
        %s241 = smul.addr %s240, 8
        %s242 = scalar_lea.vmem %s1, %s241
        %p243 = pneg %p67
        %p244 = pneg %p64
        %p245 = pneg %p88
        %p246 = pneg %p85
        %p247 = pneg %p109
        %p248 = pneg %p106
        %p249 = pneg %p130
        %p250 = pneg %p127
        %p251 = pneg %p151
        %p252 = pneg %p148
        %p253 = pneg %p177
        %p254 = pneg %p174
        %s255 = sand.u32 %s164, 1
        %s256 = scalar_lea.sflag [#allocation5], %s255
        %s257 = sand.u32 %s164, 1
        %s258 = smul.addr %s257, 64
        %s259 = scalar_lea.vmem [#allocation4], %s258
        %p260 = scmp.lt.s32.totalorder %s20, 1
        %s261 = scalar_select %p260, %s20, 1
        %s262 = smul.addr %s261, 8
        %s263 = smul.addr %s262, 8
        %s264 = scalar_lea.vmem %s0, %s263
        %p265 = scmp.lt.s32.totalorder %s20, 1
        %s266 = scalar_select %p265, %s20, 1
        %s267 = smul.addr %s266, 4
        %s268 = smul.addr %s267, 8
        %s269 = scalar_lea.vmem %s1, %s268
        %vm271 = vcmask 1043456
        %vm272 = vcmask 130052
        %vm273 = vmor %vm272, %vm271
        %274 = vst.msk [vmem:[#allocation2] sm:$0xff] %vm273, 0
        %275 = vst.msk [vmem:[#allocation2 + $0x8] sm:$0xff] %vm273, 0
        %vm276 = vcmask 1040384
        %vm277 = vcmask 126980
        %vm278 = vmor %vm277, %vm276
        %279 = vst.msk [vmem:[#allocation2 + $0x10] sm:$0x11] %vm278, 0
        %vm280 = vcmask 584704
        %281 = vst.msk [vmem:[#allocation3] sm:$0xf] %vm280, 0
        %282 = vst.msk [vmem:[#allocation3 + $0x4] sm:$0xf] %vm280, 0
        %vm283 = vcmask 581632
        %284 = vst.msk [vmem:[#allocation3 + $0x8] sm:$0x1] %vm283, 0
        %v285 = vld [vmem:[%s264] sm:$0xff]
        %v286 = vld [vmem:[%s264 + $0x8] sm:$0xff]
        %v287 = vpack.c.bf16 %v286, %v285
        %v289 = vunpack.c.l.b16 %v287
        %v290 = vunpack.c.h.b16 %v287
        %v291 = vpack.c.b16 %v289, %v289
        %v292 = vpack.c.b16 %v290, %v290
        %vm293 = vsmask.f32 256
        %vm294 = vsmask.f32 4368
        %vm295 = vmor %vm293, %vm294
        %v297 = vshrl.u32 %v291, 16
        %v299 = vrot.slane %v297, 7
        %v300 = vshll.u32 %v291, 16
        %v302 = vor.u32 %v299, %v300
        %v303 = vrot.slane %v299, 4
        %v305 = vshrl.u32 %v292, 16
        %v307 = vrot.slane %v305, 7
        %v308 = vshll.u32 %v292, 16
        %v310 = vor.u32 %v307, %v308
        %v311 = vsel %vm295, %v303, %v310
        %v312 = vrot.slane %v307, 4
        %313 = vrot.lane.b32.xlu0 %v302, 1
        %v314 = vpop.permute.xlu0 %313
        %315 = vrot.lane.b32.xlu0 %v311, 1
        %v316 = vpop.permute.xlu0 %315
        %317 = vrot.lane.b32.xlu0 %v312, 1
        %v318 = vpop.permute.xlu0 %317
        %vm322 = vcmask 134152
        %vm323 = vsmask.f32 7938
        %vm324 = vmand %vm322, %vm323
        %v325 = vld [vmem:[#allocation2] sm:$0xf]
        %v326 = vsel %vm324, %v314, %v325
        %327 = vst [vmem:[#allocation2] sm:$0xf] %v326
        %vm328 = vcmask 134152
        %329 = vst.msk [vmem:[#allocation2 + $0x8] sm:$0xf] %vm328, %v316
        %vm330 = vcmask 131080
        %vm331 = vmand %vm330, %vm293
        %v332 = vld [vmem:[#allocation2 + $0x10] sm:$0x1]
        %v333 = vsel %vm331, %v318, %v332
        %334 = vst [vmem:[#allocation2 + $0x10] sm:$0x1] %v333
        %s335 = scalar_lea.vmem %s264, 16
        %v336 = vld [vmem:[%s335] sm:$0xff]
        %v337 = vld [vmem:[%s335 + $0x8] sm:$0xff]
        %v338 = vpack.c.bf16 %v337, %v336
        %v340 = vunpack.c.l.b16 %v338
        %v341 = vunpack.c.h.b16 %v338
        %v342 = vpack.c.b16 %v340, %v340
        %v343 = vpack.c.b16 %v341, %v341
        %v345 = vshrl.u32 %v342, 16
        %v347 = vrot.slane %v345, 7
        %v348 = vshll.u32 %v342, 16
        %v350 = vor.u32 %v347, %v348
        %v351 = vrot.slane %v347, 4
        %v353 = vshrl.u32 %v343, 16
        %v355 = vrot.slane %v353, 7
        %v356 = vshll.u32 %v343, 16
        %v358 = vor.u32 %v355, %v356
        %v359 = vsel %vm295, %v351, %v358
        %v360 = vrot.slane %v355, 4
        %361 = vrot.lane.b32.xlu0 %v350, 19
        %v362 = vpop.permute.xlu0 %361
        %363 = vrot.lane.b32.xlu0 %v359, 19
        %v364 = vpop.permute.xlu0 %363
        %365 = vrot.lane.b32.xlu0 %v360, 19
        %v366 = vpop.permute.xlu0 %365
        %vm370 = vcmask 281752
        %vm371 = vmand %vm370, %vm323
        %v372 = vld [vmem:[#allocation2] sm:$0xf]
        %v373 = vsel %vm371, %v362, %v372
        %374 = vst [vmem:[#allocation2] sm:$0xf] %v373
        %vm375 = vcmask 281752
        %376 = vst.msk [vmem:[#allocation2 + $0x8] sm:$0xf] %vm375, %v364
        %vm377 = vcmask 278680
        %vm378 = vmand %vm377, %vm293
        %v379 = vld [vmem:[#allocation2 + $0x10] sm:$0x1]
        %v380 = vsel %vm378, %v366, %v379
        %381 = vst [vmem:[#allocation2 + $0x10] sm:$0x1] %v380
        %s382 = scalar_lea.vmem %s264, 32
        %v383 = vld [vmem:[%s382] sm:$0xff]
        %v384 = vld [vmem:[%s382 + $0x8] sm:$0xff]
        %v385 = vpack.c.bf16 %v384, %v383
        %v387 = vunpack.c.l.b16 %v385
        %v388 = vunpack.c.h.b16 %v385
        %v389 = vpack.c.b16 %v387, %v387
        %v390 = vpack.c.b16 %v388, %v388
        %v392 = vshrl.u32 %v389, 16
        %v394 = vrot.slane %v392, 7
        %v395 = vshll.u32 %v389, 16
        %v397 = vor.u32 %v394, %v395
        %v398 = vrot.slane %v394, 4
        %v400 = vshrl.u32 %v390, 16
        %v402 = vrot.slane %v400, 7
        %v403 = vshll.u32 %v390, 16
        %v405 = vor.u32 %v402, %v403
        %v406 = vsel %vm295, %v398, %v405
        %v407 = vrot.slane %v402, 4
        %408 = vrot.lane.b32.xlu0 %v397, 37
        %v409 = vpop.permute.xlu0 %408
        %410 = vrot.lane.b32.xlu0 %v406, 37
        %v411 = vpop.permute.xlu0 %410
        %412 = vrot.lane.b32.xlu0 %v407, 37
        %v413 = vpop.permute.xlu0 %412
        %vm417 = vcmask 429352
        %vm418 = vmand %vm417, %vm323
        %v419 = vld [vmem:[#allocation2] sm:$0xf]
        %v420 = vsel %vm418, %v409, %v419
        %421 = vst [vmem:[#allocation2] sm:$0xf] %v420
        %vm422 = vcmask 429352
        %423 = vst.msk [vmem:[#allocation2 + $0x8] sm:$0xf] %vm422, %v411
        %vm424 = vcmask 426280
        %vm425 = vmand %vm424, %vm293
        %v426 = vld [vmem:[#allocation2 + $0x10] sm:$0x1]
        %v427 = vsel %vm425, %v413, %v426
        %428 = vst [vmem:[#allocation2 + $0x10] sm:$0x1] %v427
        %s429 = scalar_lea.vmem %s264, 48
        %v430 = vld [vmem:[%s429] sm:$0xff]
        %v431 = vld [vmem:[%s429 + $0x8] sm:$0xff]
        %v432 = vpack.c.bf16 %v431, %v430
        %v434 = vunpack.c.l.b16 %v432
        %v435 = vunpack.c.h.b16 %v432
        %v436 = vpack.c.b16 %v434, %v434
        %v437 = vpack.c.b16 %v435, %v435
        %v439 = vshrl.u32 %v436, 16
        %v441 = vrot.slane %v439, 7
        %v442 = vshll.u32 %v436, 16
        %v444 = vor.u32 %v441, %v442
        %v445 = vrot.slane %v441, 4
        %v447 = vshrl.u32 %v437, 16
        %v449 = vrot.slane %v447, 7
        %v450 = vshll.u32 %v437, 16
        %v452 = vor.u32 %v449, %v450
        %v453 = vsel %vm295, %v445, %v452
        %v454 = vrot.slane %v449, 4
        %455 = vrot.lane.b32.xlu0 %v444, 55
        %v456 = vpop.permute.xlu0 %455
        %457 = vrot.lane.b32.xlu0 %v453, 55
        %v458 = vpop.permute.xlu0 %457
        %459 = vrot.lane.b32.xlu0 %v454, 55
        %v460 = vpop.permute.xlu0 %459
        %vm464 = vcmask 576952
        %vm465 = vmand %vm464, %vm323
        %v466 = vld [vmem:[#allocation2] sm:$0xf]
        %v467 = vsel %vm465, %v456, %v466
        %468 = vst [vmem:[#allocation2] sm:$0xf] %v467
        %vm469 = vcmask 576952
        %470 = vst.msk [vmem:[#allocation2 + $0x8] sm:$0xf] %vm469, %v458
        %vm471 = vcmask 573880
        %vm472 = vmand %vm471, %vm293
        %v473 = vld [vmem:[#allocation2 + $0x10] sm:$0x1]
        %v474 = vsel %vm472, %v460, %v473
        %475 = vst [vmem:[#allocation2 + $0x10] sm:$0x1] %v474
        %v476 = vld [vmem:[%s2] sm:$0xff]
        %v477 = vld [vmem:[%s2 + $0x8] sm:$0xff]
        %v478 = vld [vmem:[%s3] sm:$0xff]
        %v479 = vld [vmem:[%s269] sm:$0xff]
        %vm480 = vcmask 64512
        %v482 = vsel %vm480, %v476, 0
        %v485 = vsel %vm480, %v477, 0
        %487 = vmatprep.subr.mxu0 0.0
        %488 = vmatpush1.msra.mxu0 0.0
        %489 = vmatprep.subr.mxu0 0.0
        %490 = vmatpush1.msra.mxu0 0.0
        %491 = vmatprep.subr.mxu0 0.0
        %492 = vmatpush1.msra.mxu0 0.0
        %493 = vmatprep.subr.mxu0 0.0
        %494 = vmatpush1.msra.mxu0 0.0
        %495 = vmatprep.subr.mxu0 0.0
        %496 = vmatpush1.msra.mxu0 0.0
        %497 = vmatprep.subr.mxu0 0.0
        %498 = vmatpush1.msra.mxu0 0.0
        %499 = vmatprep.subr.mxu0 0.0
        %500 = vmatpush1.msra.mxu0 0.0
        %501 = vmatprep.subr.mxu0 0.0
        %502 = vmatpush1.msra.mxu0 0.0
        %503 = vmatprep.subr.mxu0 0.0
        %504 = vmatpush1.msra.mxu0 0.0
        %505 = vmatprep.subr.mxu0 0.0
        %506 = vmatpush1.msra.mxu0 0.0
        %507 = vmatprep.subr.mxu0 0.0
        %508 = vmatpush1.msra.mxu0 0.0
        %509 = vmatprep.subr.mxu0 0.0
        %510 = vmatpush1.msra.mxu0 0.0
        %511 = vmatprep.subr.mxu0 0.0
        %512 = vmatpush1.msra.mxu0 0.0
        %513 = vmatprep.subr.mxu0 0.0
        %514 = vmatpush1.msra.mxu0 0.0
        %515 = vmatprep.subr.mxu0 0.0
        %516 = vmatpush1.msra.mxu0 0.0
        %517 = vmatprep.subr.mxu0 0.0
        %518 = vmatpush1.msra.mxu0 %v479
        %519 = vmatprep.subr.mxu0 0.0
        %520 = vmatpush2.msra.mxu0 0.0
        %521 = vmatprep.subr.mxu0 0.0
        %522 = vmatpush2.msra.mxu0 0.0
        %523 = vmatprep.subr.mxu0 0.0
        %524 = vmatpush2.msra.mxu0 0.0
        %525 = vmatprep.subr.mxu0 0.0
        %526 = vmatpush2.msra.mxu0 0.0
        %527 = vmatprep.subr.mxu0 0.0
        %528 = vmatpush2.msra.mxu0 0.0
        %529 = vmatprep.subr.mxu0 0.0
        %530 = vmatpush2.msra.mxu0 0.0
        %531 = vmatprep.subr.mxu0 0.0
        %532 = vmatpush2.msra.mxu0 0.0
        %533 = vmatprep.subr.mxu0 0.0
        %534 = vmatpush2.msra.mxu0 0.0
        %535 = vmatprep.subr.mxu0 0.0
        %536 = vmatpush2.msra.mxu0 0.0
        %537 = vmatprep.subr.mxu0 0.0
        %538 = vmatpush2.msra.mxu0 0.0
        %539 = vmatprep.subr.mxu0 0.0
        %540 = vmatpush2.msra.mxu0 0.0
        %541 = vmatprep.subr.mxu0 0.0
        %542 = vmatpush2.msra.mxu0 0.0
        %543 = vmatprep.subr.mxu0 0.0
        %544 = vmatpush2.msra.mxu0 0.0
        %545 = vmatprep.subr.mxu0 0.0
        %546 = vmatpush2.msra.mxu0 0.0
        %547 = vmatprep.subr.mxu0 0.0
        %548 = vmatpush2.msra.mxu0 0.0
        %549 = vmatprep.subr.mxu0 0.0
        %550 = vmatpush2.msra.mxu0 0.0
        %551 = vmatprep.mubr.f32.mxu0 0.0
        %552 = vmatmul.mubr.f32.gmra.mxu0 %v482
        %v553 = vpop.f32.mrf.mxu0
        %v554 = vadd.f32 0.0, %v553
        %v555 = vpop.f32.mrf.mxu0
        %556 = vmatprep.mubr.f32.mxu0 0.0
        %557 = vmatmul.mubr.f32.gmra.mxu0 %v485
        %v558 = vpop.f32.mrf.mxu0
        %v559 = vadd.f32 0.0, %v558
        %v560 = vpop.f32.mrf.mxu0
        %561 = vdwg.mxu0
        %v563 = vsel %vm480, %v554, 0
        %v566 = vsel %vm480, %v559, 0
        %568 = vmatprep.subr.mxu0 0.0
        %569 = vmatpush1.msra.mxu0 0.0
        %570 = vmatprep.subr.mxu0 0.0
        %571 = vmatpush1.msra.mxu0 0.0
        %572 = vmatprep.subr.mxu0 0.0
        %573 = vmatpush1.msra.mxu0 0.0
        %574 = vmatprep.subr.mxu0 0.0
        %575 = vmatpush1.msra.mxu0 0.0
        %576 = vmatprep.subr.mxu0 0.0
        %577 = vmatpush1.msra.mxu0 0.0
        %578 = vmatprep.subr.mxu0 0.0
        %579 = vmatpush1.msra.mxu0 0.0
        %580 = vmatprep.subr.mxu0 0.0
        %581 = vmatpush1.msra.mxu0 0.0
        %582 = vmatprep.subr.mxu0 0.0
        %583 = vmatpush1.msra.mxu0 0.0
        %584 = vmatprep.subr.mxu0 0.0
        %585 = vmatpush1.msra.mxu0 0.0
        %586 = vmatprep.subr.mxu0 0.0
        %587 = vmatpush1.msra.mxu0 0.0
        %588 = vmatprep.subr.mxu0 0.0
        %589 = vmatpush1.msra.mxu0 0.0
        %590 = vmatprep.subr.mxu0 0.0
        %591 = vmatpush1.msra.mxu0 0.0
        %592 = vmatprep.subr.mxu0 0.0
        %593 = vmatpush1.msra.mxu0 0.0
        %594 = vmatprep.subr.mxu0 0.0
        %595 = vmatpush1.msra.mxu0 0.0
        %596 = vmatprep.subr.mxu0 0.0
        %597 = vmatpush1.msra.mxu0 0.0
        %598 = vmatprep.subr.mxu0 0.0
        %599 = vmatpush1.msra.mxu0 %v478
        %600 = vmatprep.subr.mxu0 0.0
        %601 = vmatpush2.msra.mxu0 0.0
        %602 = vmatprep.subr.mxu0 0.0
        %603 = vmatpush2.msra.mxu0 0.0
        %604 = vmatprep.subr.mxu0 0.0
        %605 = vmatpush2.msra.mxu0 0.0
        %606 = vmatprep.subr.mxu0 0.0
        %607 = vmatpush2.msra.mxu0 0.0
        %608 = vmatprep.subr.mxu0 0.0
        %609 = vmatpush2.msra.mxu0 0.0
        %610 = vmatprep.subr.mxu0 0.0
        %611 = vmatpush2.msra.mxu0 0.0
        %612 = vmatprep.subr.mxu0 0.0
        %613 = vmatpush2.msra.mxu0 0.0
        %614 = vmatprep.subr.mxu0 0.0
        %615 = vmatpush2.msra.mxu0 0.0
        %616 = vmatprep.subr.mxu0 0.0
        %617 = vmatpush2.msra.mxu0 0.0
        %618 = vmatprep.subr.mxu0 0.0
        %619 = vmatpush2.msra.mxu0 0.0
        %620 = vmatprep.subr.mxu0 0.0
        %621 = vmatpush2.msra.mxu0 0.0
        %622 = vmatprep.subr.mxu0 0.0
        %623 = vmatpush2.msra.mxu0 0.0
        %624 = vmatprep.subr.mxu0 0.0
        %625 = vmatpush2.msra.mxu0 0.0
        %626 = vmatprep.subr.mxu0 0.0
        %627 = vmatpush2.msra.mxu0 0.0
        %628 = vmatprep.subr.mxu0 0.0
        %629 = vmatpush2.msra.mxu0 0.0
        %630 = vmatprep.subr.mxu0 0.0
        %631 = vmatpush2.msra.mxu0 0.0
        %632 = vmatprep.mubr.f32.mxu0 0.0
        %633 = vmatmul.mubr.f32.gmra.mxu0 %v563
        %v634 = vpop.f32.mrf.mxu0
        %v635 = vadd.f32 0.0, %v634
        %v636 = vpop.f32.mrf.mxu0
        %637 = vmatprep.mubr.f32.mxu0 0.0
        %638 = vmatmul.mubr.f32.gmra.mxu0 %v566
        %v639 = vpop.f32.mrf.mxu0
        %v640 = vadd.f32 0.0, %v639
        %v641 = vpop.f32.mrf.mxu0
        %642 = vdwg.mxu0
        %v643 = vpack.c.bf16 %v640, %v635
        %v645 = vunpack.c.l.b16 %v643
        %v646 = vunpack.c.h.b16 %v643
        %v647 = vpack.c.b16 %v645, %v645
        %v648 = vpack.c.b16 %v646, %v646
        %v650 = vshrl.u32 %v647, 16
        %v652 = vrot.slane %v650, 7
        %v653 = vshll.u32 %v647, 16
        %v655 = vor.u32 %v652, %v653
        %v656 = vrot.slane %v652, 4
        %v658 = vshrl.u32 %v648, 16
        %v660 = vrot.slane %v658, 7
        %v661 = vshll.u32 %v648, 16
        %v663 = vor.u32 %v660, %v661
        %v664 = vsel %vm295, %v656, %v663
        %v665 = vrot.slane %v660, 4
        %666 = vrot.lane.b32.xlu0 %v655, 73
        %v667 = vpop.permute.xlu0 %666
        %668 = vrot.lane.b32.xlu0 %v664, 73
        %v669 = vpop.permute.xlu0 %668
        %670 = vrot.lane.b32.xlu0 %v665, 73
        %v671 = vpop.permute.xlu0 %670
        %vm675 = vcmask 724552
        %vm676 = vmand %vm675, %vm323
        %v677 = vld [vmem:[#allocation2] sm:$0xf]
        %v678 = vsel %vm676, %v667, %v677
        %679 = vst [vmem:[#allocation2] sm:$0xf] %v678
        %vm680 = vcmask 724552
        %681 = vst.msk [vmem:[#allocation2 + $0x8] sm:$0xf] %vm680, %v669
        %vm682 = vcmask 721480
        %vm683 = vmand %vm682, %vm293
        %v684 = vld [vmem:[#allocation2 + $0x10] sm:$0x1]
        %v685 = vsel %vm683, %v671, %v684
        %686 = vst [vmem:[#allocation2 + $0x10] sm:$0x1] %v685
        %s687 = scalar_lea.vmem %s269, 8
        %v688 = vld [vmem:[%s687] sm:$0xff]
        %689 = vmatprep.subr.mxu0 0.0
        %690 = vmatpush1.msra.mxu0 0.0
        %691 = vmatprep.subr.mxu0 0.0
        %692 = vmatpush1.msra.mxu0 0.0
        %693 = vmatprep.subr.mxu0 0.0
        %694 = vmatpush1.msra.mxu0 0.0
        %695 = vmatprep.subr.mxu0 0.0
        %696 = vmatpush1.msra.mxu0 0.0
        %697 = vmatprep.subr.mxu0 0.0
        %698 = vmatpush1.msra.mxu0 0.0
        %699 = vmatprep.subr.mxu0 0.0
        %700 = vmatpush1.msra.mxu0 0.0
        %701 = vmatprep.subr.mxu0 0.0
        %702 = vmatpush1.msra.mxu0 0.0
        %703 = vmatprep.subr.mxu0 0.0
        %704 = vmatpush1.msra.mxu0 0.0
        %705 = vmatprep.subr.mxu0 0.0
        %706 = vmatpush1.msra.mxu0 0.0
        %707 = vmatprep.subr.mxu0 0.0
        %708 = vmatpush1.msra.mxu0 0.0
        %709 = vmatprep.subr.mxu0 0.0
        %710 = vmatpush1.msra.mxu0 0.0
        %711 = vmatprep.subr.mxu0 0.0
        %712 = vmatpush1.msra.mxu0 0.0
        %713 = vmatprep.subr.mxu0 0.0
        %714 = vmatpush1.msra.mxu0 0.0
        %715 = vmatprep.subr.mxu0 0.0
        %716 = vmatpush1.msra.mxu0 0.0
        %717 = vmatprep.subr.mxu0 0.0
        %718 = vmatpush1.msra.mxu0 0.0
        %719 = vmatprep.subr.mxu0 0.0
        %720 = vmatpush1.msra.mxu0 %v688
        %721 = vmatprep.subr.mxu0 0.0
        %722 = vmatpush2.msra.mxu0 0.0
        %723 = vmatprep.subr.mxu0 0.0
        %724 = vmatpush2.msra.mxu0 0.0
        %725 = vmatprep.subr.mxu0 0.0
        %726 = vmatpush2.msra.mxu0 0.0
        %727 = vmatprep.subr.mxu0 0.0
        %728 = vmatpush2.msra.mxu0 0.0
        %729 = vmatprep.subr.mxu0 0.0
        %730 = vmatpush2.msra.mxu0 0.0
        %731 = vmatprep.subr.mxu0 0.0
        %732 = vmatpush2.msra.mxu0 0.0
        %733 = vmatprep.subr.mxu0 0.0
        %734 = vmatpush2.msra.mxu0 0.0
        %735 = vmatprep.subr.mxu0 0.0
        %736 = vmatpush2.msra.mxu0 0.0
        %737 = vmatprep.subr.mxu0 0.0
        %738 = vmatpush2.msra.mxu0 0.0
        %739 = vmatprep.subr.mxu0 0.0
        %740 = vmatpush2.msra.mxu0 0.0
        %741 = vmatprep.subr.mxu0 0.0
        %742 = vmatpush2.msra.mxu0 0.0
        %743 = vmatprep.subr.mxu0 0.0
        %744 = vmatpush2.msra.mxu0 0.0
        %745 = vmatprep.subr.mxu0 0.0
        %746 = vmatpush2.msra.mxu0 0.0
        %747 = vmatprep.subr.mxu0 0.0
        %748 = vmatpush2.msra.mxu0 0.0
        %749 = vmatprep.subr.mxu0 0.0
        %750 = vmatpush2.msra.mxu0 0.0
        %751 = vmatprep.subr.mxu0 0.0
        %752 = vmatpush2.msra.mxu0 0.0
        %753 = vmatprep.mubr.f32.mxu0 0.0
        %754 = vmatmul.mubr.f32.gmra.mxu0 %v482
        %v755 = vpop.f32.mrf.mxu0
        %v756 = vadd.f32 0.0, %v755
        %v757 = vpop.f32.mrf.mxu0
        %758 = vmatprep.mubr.f32.mxu0 0.0
        %759 = vmatmul.mubr.f32.gmra.mxu0 %v485
        %v760 = vpop.f32.mrf.mxu0
        %v761 = vadd.f32 0.0, %v760
        %v762 = vpop.f32.mrf.mxu0
        %763 = vdwg.mxu0
        %v765 = vsel %vm480, %v756, 0
        %v768 = vsel %vm480, %v761, 0
        %770 = vmatprep.subr.mxu0 0.0
        %771 = vmatpush1.msra.mxu0 0.0
        %772 = vmatprep.subr.mxu0 0.0
        %773 = vmatpush1.msra.mxu0 0.0
        %774 = vmatprep.subr.mxu0 0.0
        %775 = vmatpush1.msra.mxu0 0.0
        %776 = vmatprep.subr.mxu0 0.0
        %777 = vmatpush1.msra.mxu0 0.0
        %778 = vmatprep.subr.mxu0 0.0
        %779 = vmatpush1.msra.mxu0 0.0
        %780 = vmatprep.subr.mxu0 0.0
        %781 = vmatpush1.msra.mxu0 0.0
        %782 = vmatprep.subr.mxu0 0.0
        %783 = vmatpush1.msra.mxu0 0.0
        %784 = vmatprep.subr.mxu0 0.0
        %785 = vmatpush1.msra.mxu0 0.0
        %786 = vmatprep.subr.mxu0 0.0
        %787 = vmatpush1.msra.mxu0 0.0
        %788 = vmatprep.subr.mxu0 0.0
        %789 = vmatpush1.msra.mxu0 0.0
        %790 = vmatprep.subr.mxu0 0.0
        %791 = vmatpush1.msra.mxu0 0.0
        %792 = vmatprep.subr.mxu0 0.0
        %793 = vmatpush1.msra.mxu0 0.0
        %794 = vmatprep.subr.mxu0 0.0
        %795 = vmatpush1.msra.mxu0 0.0
        %796 = vmatprep.subr.mxu0 0.0
        %797 = vmatpush1.msra.mxu0 0.0
        %798 = vmatprep.subr.mxu0 0.0
        %799 = vmatpush1.msra.mxu0 0.0
        %800 = vmatprep.subr.mxu0 0.0
        %801 = vmatpush1.msra.mxu0 %v478
        %802 = vmatprep.subr.mxu0 0.0
        %803 = vmatpush2.msra.mxu0 0.0
        %804 = vmatprep.subr.mxu0 0.0
        %805 = vmatpush2.msra.mxu0 0.0
        %806 = vmatprep.subr.mxu0 0.0
        %807 = vmatpush2.msra.mxu0 0.0
        %808 = vmatprep.subr.mxu0 0.0
        %809 = vmatpush2.msra.mxu0 0.0
        %810 = vmatprep.subr.mxu0 0.0
        %811 = vmatpush2.msra.mxu0 0.0
        %812 = vmatprep.subr.mxu0 0.0
        %813 = vmatpush2.msra.mxu0 0.0
        %814 = vmatprep.subr.mxu0 0.0
        %815 = vmatpush2.msra.mxu0 0.0
        %816 = vmatprep.subr.mxu0 0.0
        %817 = vmatpush2.msra.mxu0 0.0
        %818 = vmatprep.subr.mxu0 0.0
        %819 = vmatpush2.msra.mxu0 0.0
        %820 = vmatprep.subr.mxu0 0.0
        %821 = vmatpush2.msra.mxu0 0.0
        %822 = vmatprep.subr.mxu0 0.0
        %823 = vmatpush2.msra.mxu0 0.0
        %824 = vmatprep.subr.mxu0 0.0
        %825 = vmatpush2.msra.mxu0 0.0
        %826 = vmatprep.subr.mxu0 0.0
        %827 = vmatpush2.msra.mxu0 0.0
        %828 = vmatprep.subr.mxu0 0.0
        %829 = vmatpush2.msra.mxu0 0.0
        %830 = vmatprep.subr.mxu0 0.0
        %831 = vmatpush2.msra.mxu0 0.0
        %832 = vmatprep.subr.mxu0 0.0
        %833 = vmatpush2.msra.mxu0 0.0
        %834 = vmatprep.mubr.f32.mxu0 0.0
        %835 = vmatmul.mubr.f32.gmra.mxu0 %v765
        %v836 = vpop.f32.mrf.mxu0
        %v837 = vadd.f32 0.0, %v836
        %v838 = vpop.f32.mrf.mxu0
        %839 = vmatprep.mubr.f32.mxu0 0.0
        %840 = vmatmul.mubr.f32.gmra.mxu0 %v768
        %v841 = vpop.f32.mrf.mxu0
        %v842 = vadd.f32 0.0, %v841
        %v843 = vpop.f32.mrf.mxu0
        %844 = vdwg.mxu0
        %v845 = vpack.c.bf16 %v842, %v837
        %v847 = vunpack.c.l.b16 %v845
        %v848 = vunpack.c.h.b16 %v845
        %v849 = vpack.c.b16 %v847, %v847
        %v850 = vpack.c.b16 %v848, %v848
        %v852 = vshrl.u32 %v849, 16
        %v854 = vrot.slane %v852, 7
        %v855 = vshll.u32 %v849, 16
        %v857 = vor.u32 %v854, %v855
        %v858 = vrot.slane %v854, 4
        %v860 = vshrl.u32 %v850, 16
        %v862 = vrot.slane %v860, 7
        %v863 = vshll.u32 %v850, 16
        %v865 = vor.u32 %v862, %v863
        %v866 = vsel %vm295, %v858, %v865
        %v867 = vrot.slane %v862, 4
        %868 = vrot.lane.b32.xlu0 %v857, 91
        %v869 = vpop.permute.xlu0 %868
        %870 = vrot.lane.b32.xlu0 %v866, 91
        %v871 = vpop.permute.xlu0 %870
        %872 = vrot.lane.b32.xlu0 %v867, 91
        %v873 = vpop.permute.xlu0 %872
        %vm877 = vcmask 872152
        %vm878 = vmand %vm877, %vm323
        %v879 = vld [vmem:[#allocation2] sm:$0xf]
        %v880 = vsel %vm878, %v869, %v879
        %881 = vst [vmem:[#allocation2] sm:$0xf] %v880
        %vm882 = vcmask 872152
        %883 = vst.msk [vmem:[#allocation2 + $0x8] sm:$0xf] %vm882, %v871
        %vm884 = vcmask 869080
        %vm885 = vmand %vm884, %vm293
        %v886 = vld [vmem:[#allocation2 + $0x10] sm:$0x1]
        %v887 = vsel %vm885, %v873, %v886
        %888 = vst [vmem:[#allocation2 + $0x10] sm:$0x1] %v887
        %s889 = scalar_lea.vmem %s269, 16
        %v890 = vld [vmem:[%s889] sm:$0xff]
        %891 = vmatprep.subr.mxu0 0.0
        %892 = vmatpush1.msra.mxu0 0.0
        %893 = vmatprep.subr.mxu0 0.0
        %894 = vmatpush1.msra.mxu0 0.0
        %895 = vmatprep.subr.mxu0 0.0
        %896 = vmatpush1.msra.mxu0 0.0
        %897 = vmatprep.subr.mxu0 0.0
        %898 = vmatpush1.msra.mxu0 0.0
        %899 = vmatprep.subr.mxu0 0.0
        %900 = vmatpush1.msra.mxu0 0.0
        %901 = vmatprep.subr.mxu0 0.0
        %902 = vmatpush1.msra.mxu0 0.0
        %903 = vmatprep.subr.mxu0 0.0
        %904 = vmatpush1.msra.mxu0 0.0
        %905 = vmatprep.subr.mxu0 0.0
        %906 = vmatpush1.msra.mxu0 0.0
        %907 = vmatprep.subr.mxu0 0.0
        %908 = vmatpush1.msra.mxu0 0.0
        %909 = vmatprep.subr.mxu0 0.0
        %910 = vmatpush1.msra.mxu0 0.0
        %911 = vmatprep.subr.mxu0 0.0
        %912 = vmatpush1.msra.mxu0 0.0
        %913 = vmatprep.subr.mxu0 0.0
        %914 = vmatpush1.msra.mxu0 0.0
        %915 = vmatprep.subr.mxu0 0.0
        %916 = vmatpush1.msra.mxu0 0.0
        %917 = vmatprep.subr.mxu0 0.0
        %918 = vmatpush1.msra.mxu0 0.0
        %919 = vmatprep.subr.mxu0 0.0
        %920 = vmatpush1.msra.mxu0 0.0
        %921 = vmatprep.subr.mxu0 0.0
        %922 = vmatpush1.msra.mxu0 %v890
        %923 = vmatprep.subr.mxu0 0.0
        %924 = vmatpush2.msra.mxu0 0.0
        %925 = vmatprep.subr.mxu0 0.0
        %926 = vmatpush2.msra.mxu0 0.0
        %927 = vmatprep.subr.mxu0 0.0
        %928 = vmatpush2.msra.mxu0 0.0
        %929 = vmatprep.subr.mxu0 0.0
        %930 = vmatpush2.msra.mxu0 0.0
        %931 = vmatprep.subr.mxu0 0.0
        %932 = vmatpush2.msra.mxu0 0.0
        %933 = vmatprep.subr.mxu0 0.0
        %934 = vmatpush2.msra.mxu0 0.0
        %935 = vmatprep.subr.mxu0 0.0
        %936 = vmatpush2.msra.mxu0 0.0
        %937 = vmatprep.subr.mxu0 0.0
        %938 = vmatpush2.msra.mxu0 0.0
        %939 = vmatprep.subr.mxu0 0.0
        %940 = vmatpush2.msra.mxu0 0.0
        %941 = vmatprep.subr.mxu0 0.0
        %942 = vmatpush2.msra.mxu0 0.0
        %943 = vmatprep.subr.mxu0 0.0
        %944 = vmatpush2.msra.mxu0 0.0
        %945 = vmatprep.subr.mxu0 0.0
        %946 = vmatpush2.msra.mxu0 0.0
        %947 = vmatprep.subr.mxu0 0.0
        %948 = vmatpush2.msra.mxu0 0.0
        %949 = vmatprep.subr.mxu0 0.0
        %950 = vmatpush2.msra.mxu0 0.0
        %951 = vmatprep.subr.mxu0 0.0
        %952 = vmatpush2.msra.mxu0 0.0
        %953 = vmatprep.subr.mxu0 0.0
        %954 = vmatpush2.msra.mxu0 0.0
        %955 = vmatprep.mubr.f32.mxu0 0.0
        %956 = vmatmul.mubr.f32.gmra.mxu0 %v482
        %v957 = vpop.f32.mrf.mxu0
        %v958 = vadd.f32 0.0, %v957
        %v959 = vpop.f32.mrf.mxu0
        %960 = vmatprep.mubr.f32.mxu0 0.0
        %961 = vmatmul.mubr.f32.gmra.mxu0 %v485
        %v962 = vpop.f32.mrf.mxu0
        %v963 = vadd.f32 0.0, %v962
        %v964 = vpop.f32.mrf.mxu0
        %965 = vdwg.mxu0
        %v967 = vsel %vm480, %v958, 0
        %v970 = vsel %vm480, %v963, 0
        %972 = vmatprep.subr.mxu0 0.0
        %973 = vmatpush1.msra.mxu0 0.0
        %974 = vmatprep.subr.mxu0 0.0
        %975 = vmatpush1.msra.mxu0 0.0
        %976 = vmatprep.subr.mxu0 0.0
        %977 = vmatpush1.msra.mxu0 0.0
        %978 = vmatprep.subr.mxu0 0.0
        %979 = vmatpush1.msra.mxu0 0.0
        %980 = vmatprep.subr.mxu0 0.0
        %981 = vmatpush1.msra.mxu0 0.0
        %982 = vmatprep.subr.mxu0 0.0
        %983 = vmatpush1.msra.mxu0 0.0
        %984 = vmatprep.subr.mxu0 0.0
        %985 = vmatpush1.msra.mxu0 0.0
        %986 = vmatprep.subr.mxu0 0.0
        %987 = vmatpush1.msra.mxu0 0.0
        %988 = vmatprep.subr.mxu0 0.0
        %989 = vmatpush1.msra.mxu0 0.0
        %990 = vmatprep.subr.mxu0 0.0
        %991 = vmatpush1.msra.mxu0 0.0
        %992 = vmatprep.subr.mxu0 0.0
        %993 = vmatpush1.msra.mxu0 0.0
        %994 = vmatprep.subr.mxu0 0.0
        %995 = vmatpush1.msra.mxu0 0.0
        %996 = vmatprep.subr.mxu0 0.0
        %997 = vmatpush1.msra.mxu0 0.0
        %998 = vmatprep.subr.mxu0 0.0
        %999 = vmatpush1.msra.mxu0 0.0
        %1000 = vmatprep.subr.mxu0 0.0
        %1001 = vmatpush1.msra.mxu0 0.0
        %1002 = vmatprep.subr.mxu0 0.0
        %1003 = vmatpush1.msra.mxu0 %v478
        %1004 = vmatprep.subr.mxu0 0.0
        %1005 = vmatpush2.msra.mxu0 0.0
        %1006 = vmatprep.subr.mxu0 0.0
        %1007 = vmatpush2.msra.mxu0 0.0
        %1008 = vmatprep.subr.mxu0 0.0
        %1009 = vmatpush2.msra.mxu0 0.0
        %1010 = vmatprep.subr.mxu0 0.0
        %1011 = vmatpush2.msra.mxu0 0.0
        %1012 = vmatprep.subr.mxu0 0.0
        %1013 = vmatpush2.msra.mxu0 0.0
        %1014 = vmatprep.subr.mxu0 0.0
        %1015 = vmatpush2.msra.mxu0 0.0
        %1016 = vmatprep.subr.mxu0 0.0
        %1017 = vmatpush2.msra.mxu0 0.0
        %1018 = vmatprep.subr.mxu0 0.0
        %1019 = vmatpush2.msra.mxu0 0.0
        %1020 = vmatprep.subr.mxu0 0.0
        %1021 = vmatpush2.msra.mxu0 0.0
        %1022 = vmatprep.subr.mxu0 0.0
        %1023 = vmatpush2.msra.mxu0 0.0
        %1024 = vmatprep.subr.mxu0 0.0
        %1025 = vmatpush2.msra.mxu0 0.0
        %1026 = vmatprep.subr.mxu0 0.0
        %1027 = vmatpush2.msra.mxu0 0.0
        %1028 = vmatprep.subr.mxu0 0.0
        %1029 = vmatpush2.msra.mxu0 0.0
        %1030 = vmatprep.subr.mxu0 0.0
        %1031 = vmatpush2.msra.mxu0 0.0
        %1032 = vmatprep.subr.mxu0 0.0
        %1033 = vmatpush2.msra.mxu0 0.0
        %1034 = vmatprep.subr.mxu0 0.0
        %1035 = vmatpush2.msra.mxu0 0.0
        %1036 = vmatprep.mubr.f32.mxu0 0.0
        %1037 = vmatmul.mubr.f32.gmra.mxu0 %v967
        %v1038 = vpop.f32.mrf.mxu0
        %v1039 = vadd.f32 0.0, %v1038
        %v1040 = vpop.f32.mrf.mxu0
        %1041 = vmatprep.mubr.f32.mxu0 0.0
        %1042 = vmatmul.mubr.f32.gmra.mxu0 %v970
        %v1043 = vpop.f32.mrf.mxu0
        %v1044 = vadd.f32 0.0, %v1043
        %v1045 = vpop.f32.mrf.mxu0
        %1046 = vdwg.mxu0
        %v1047 = vpack.c.bf16 %v1044, %v1039
        %v1049 = vunpack.c.l.b16 %v1047
        %v1050 = vunpack.c.h.b16 %v1047
        %v1051 = vpack.c.b16 %v1049, %v1049
        %v1052 = vpack.c.b16 %v1050, %v1050
        %v1054 = vshrl.u32 %v1051, 16
        %v1056 = vrot.slane %v1054, 7
        %v1057 = vshll.u32 %v1051, 16
        %v1059 = vor.u32 %v1056, %v1057
        %v1060 = vrot.slane %v1056, 4
        %v1062 = vshrl.u32 %v1052, 16
        %v1064 = vrot.slane %v1062, 7
        %v1065 = vshll.u32 %v1052, 16
        %v1067 = vor.u32 %v1064, %v1065
        %v1068 = vsel %vm295, %v1060, %v1067
        %v1069 = vrot.slane %v1064, 4
        %1070 = vrot.lane.b32.xlu0 %v1059, 109
        %v1071 = vpop.permute.xlu0 %1070
        %1072 = vrot.lane.b32.xlu0 %v1068, 109
        %v1073 = vpop.permute.xlu0 %1072
        %1074 = vrot.lane.b32.xlu0 %v1069, 109
        %v1075 = vpop.permute.xlu0 %1074
        %vm1079 = vcmask 1019752
        %vm1080 = vmand %vm1079, %vm323
        %v1081 = vld [vmem:[#allocation2] sm:$0xf]
        %v1082 = vsel %vm1080, %v1071, %v1081
        %1083 = vst [vmem:[#allocation2] sm:$0xf] %v1082
        %vm1084 = vcmask 1019752
        %1085 = vst.msk [vmem:[#allocation2 + $0x8] sm:$0xf] %vm1084, %v1073
        %vm1086 = vcmask 1016680
        %vm1087 = vmand %vm1086, %vm293
        %v1088 = vld [vmem:[#allocation2 + $0x10] sm:$0x1]
        %v1089 = vsel %vm1087, %v1075, %v1088
        %1090 = vst [vmem:[#allocation2 + $0x10] sm:$0x1] %v1089
        %s1091 = scalar_lea.vmem %s269, 24
        %v1092 = vld [vmem:[%s1091] sm:$0xff]
        %1093 = vmatprep.subr.mxu0 0.0
        %1094 = vmatpush1.msra.mxu0 0.0
        %1095 = vmatprep.subr.mxu0 0.0
        %1096 = vmatpush1.msra.mxu0 0.0
        %1097 = vmatprep.subr.mxu0 0.0
        %1098 = vmatpush1.msra.mxu0 0.0
        %1099 = vmatprep.subr.mxu0 0.0
        %1100 = vmatpush1.msra.mxu0 0.0
        %1101 = vmatprep.subr.mxu0 0.0
        %1102 = vmatpush1.msra.mxu0 0.0
        %1103 = vmatprep.subr.mxu0 0.0
        %1104 = vmatpush1.msra.mxu0 0.0
        %1105 = vmatprep.subr.mxu0 0.0
        %1106 = vmatpush1.msra.mxu0 0.0
        %1107 = vmatprep.subr.mxu0 0.0
        %1108 = vmatpush1.msra.mxu0 0.0
        %1109 = vmatprep.subr.mxu0 0.0
        %1110 = vmatpush1.msra.mxu0 0.0
        %1111 = vmatprep.subr.mxu0 0.0
        %1112 = vmatpush1.msra.mxu0 0.0
        %1113 = vmatprep.subr.mxu0 0.0
        %1114 = vmatpush1.msra.mxu0 0.0
        %1115 = vmatprep.subr.mxu0 0.0
        %1116 = vmatpush1.msra.mxu0 0.0
        %1117 = vmatprep.subr.mxu0 0.0
        %1118 = vmatpush1.msra.mxu0 0.0
        %1119 = vmatprep.subr.mxu0 0.0
        %1120 = vmatpush1.msra.mxu0 0.0
        %1121 = vmatprep.subr.mxu0 0.0
        %1122 = vmatpush1.msra.mxu0 0.0
        %1123 = vmatprep.subr.mxu0 0.0
        %1124 = vmatpush1.msra.mxu0 %v1092
        %1125 = vmatprep.subr.mxu0 0.0
        %1126 = vmatpush2.msra.mxu0 0.0
        %1127 = vmatprep.subr.mxu0 0.0
        %1128 = vmatpush2.msra.mxu0 0.0
        %1129 = vmatprep.subr.mxu0 0.0
        %1130 = vmatpush2.msra.mxu0 0.0
        %1131 = vmatprep.subr.mxu0 0.0
        %1132 = vmatpush2.msra.mxu0 0.0
        %1133 = vmatprep.subr.mxu0 0.0
        %1134 = vmatpush2.msra.mxu0 0.0
        %1135 = vmatprep.subr.mxu0 0.0
        %1136 = vmatpush2.msra.mxu0 0.0
        %1137 = vmatprep.subr.mxu0 0.0
        %1138 = vmatpush2.msra.mxu0 0.0
        %1139 = vmatprep.subr.mxu0 0.0
        %1140 = vmatpush2.msra.mxu0 0.0
        %1141 = vmatprep.subr.mxu0 0.0
        %1142 = vmatpush2.msra.mxu0 0.0
        %1143 = vmatprep.subr.mxu0 0.0
        %1144 = vmatpush2.msra.mxu0 0.0
        %1145 = vmatprep.subr.mxu0 0.0
        %1146 = vmatpush2.msra.mxu0 0.0
        %1147 = vmatprep.subr.mxu0 0.0
        %1148 = vmatpush2.msra.mxu0 0.0
        %1149 = vmatprep.subr.mxu0 0.0
        %1150 = vmatpush2.msra.mxu0 0.0
        %1151 = vmatprep.subr.mxu0 0.0
        %1152 = vmatpush2.msra.mxu0 0.0
        %1153 = vmatprep.subr.mxu0 0.0
        %1154 = vmatpush2.msra.mxu0 0.0
        %1155 = vmatprep.subr.mxu0 0.0
        %1156 = vmatpush2.msra.mxu0 0.0
        %1157 = vmatprep.mubr.f32.mxu0 0.0
        %1158 = vmatmul.mubr.f32.gmra.mxu0 %v482
        %v1159 = vpop.f32.mrf.mxu0
        %v1160 = vadd.f32 0.0, %v1159
        %v1161 = vpop.f32.mrf.mxu0
        %1162 = vmatprep.mubr.f32.mxu0 0.0
        %1163 = vmatmul.mubr.f32.gmra.mxu0 %v485
        %v1164 = vpop.f32.mrf.mxu0
        %v1165 = vadd.f32 0.0, %v1164
        %v1166 = vpop.f32.mrf.mxu0
        %1167 = vdwg.mxu0
        %v1169 = vsel %vm480, %v1160, 0
        %v1172 = vsel %vm480, %v1165, 0
        %1174 = vmatprep.subr.mxu0 0.0
        %1175 = vmatpush1.msra.mxu0 0.0
        %1176 = vmatprep.subr.mxu0 0.0
        %1177 = vmatpush1.msra.mxu0 0.0
        %1178 = vmatprep.subr.mxu0 0.0
        %1179 = vmatpush1.msra.mxu0 0.0
        %1180 = vmatprep.subr.mxu0 0.0
        %1181 = vmatpush1.msra.mxu0 0.0
        %1182 = vmatprep.subr.mxu0 0.0
        %1183 = vmatpush1.msra.mxu0 0.0
        %1184 = vmatprep.subr.mxu0 0.0
        %1185 = vmatpush1.msra.mxu0 0.0
        %1186 = vmatprep.subr.mxu0 0.0
        %1187 = vmatpush1.msra.mxu0 0.0
        %1188 = vmatprep.subr.mxu0 0.0
        %1189 = vmatpush1.msra.mxu0 0.0
        %1190 = vmatprep.subr.mxu0 0.0
        %1191 = vmatpush1.msra.mxu0 0.0
        %1192 = vmatprep.subr.mxu0 0.0
        %1193 = vmatpush1.msra.mxu0 0.0
        %1194 = vmatprep.subr.mxu0 0.0
        %1195 = vmatpush1.msra.mxu0 0.0
        %1196 = vmatprep.subr.mxu0 0.0
        %1197 = vmatpush1.msra.mxu0 0.0
        %1198 = vmatprep.subr.mxu0 0.0
        %1199 = vmatpush1.msra.mxu0 0.0
        %1200 = vmatprep.subr.mxu0 0.0
        %1201 = vmatpush1.msra.mxu0 0.0
        %1202 = vmatprep.subr.mxu0 0.0
        %1203 = vmatpush1.msra.mxu0 0.0
        %1204 = vmatprep.subr.mxu0 0.0
        %1205 = vmatpush1.msra.mxu0 %v478
        %1206 = vmatprep.subr.mxu0 0.0
        %1207 = vmatpush2.msra.mxu0 0.0
        %1208 = vmatprep.subr.mxu0 0.0
        %1209 = vmatpush2.msra.mxu0 0.0
        %1210 = vmatprep.subr.mxu0 0.0
        %1211 = vmatpush2.msra.mxu0 0.0
        %1212 = vmatprep.subr.mxu0 0.0
        %1213 = vmatpush2.msra.mxu0 0.0
        %1214 = vmatprep.subr.mxu0 0.0
        %1215 = vmatpush2.msra.mxu0 0.0
        %1216 = vmatprep.subr.mxu0 0.0
        %1217 = vmatpush2.msra.mxu0 0.0
        %1218 = vmatprep.subr.mxu0 0.0
        %1219 = vmatpush2.msra.mxu0 0.0
        %1220 = vmatprep.subr.mxu0 0.0
        %1221 = vmatpush2.msra.mxu0 0.0
        %1222 = vmatprep.subr.mxu0 0.0
        %1223 = vmatpush2.msra.mxu0 0.0
        %1224 = vmatprep.subr.mxu0 0.0
        %1225 = vmatpush2.msra.mxu0 0.0
        %1226 = vmatprep.subr.mxu0 0.0
        %1227 = vmatpush2.msra.mxu0 0.0
        %1228 = vmatprep.subr.mxu0 0.0
        %1229 = vmatpush2.msra.mxu0 0.0
        %1230 = vmatprep.subr.mxu0 0.0
        %1231 = vmatpush2.msra.mxu0 0.0
        %1232 = vmatprep.subr.mxu0 0.0
        %1233 = vmatpush2.msra.mxu0 0.0
        %1234 = vmatprep.subr.mxu0 0.0
        %1235 = vmatpush2.msra.mxu0 0.0
        %1236 = vmatprep.subr.mxu0 0.0
        %1237 = vmatpush2.msra.mxu0 0.0
        %1238 = vmatprep.mubr.f32.mxu0 0.0
        %1239 = vmatmul.mubr.f32.gmra.mxu0 %v1169
        %v1240 = vpop.f32.mrf.mxu0
        %v1241 = vadd.f32 0.0, %v1240
        %v1242 = vpop.f32.mrf.mxu0
        %1243 = vmatprep.mubr.f32.mxu0 0.0
        %1244 = vmatmul.mubr.f32.gmra.mxu0 %v1172
        %v1245 = vpop.f32.mrf.mxu0
        %v1246 = vadd.f32 0.0, %v1245
        %v1247 = vpop.f32.mrf.mxu0
        %1248 = vdwg.mxu0
        %v1249 = vpack.c.bf16 %v1246, %v1241
        %v1251 = vunpack.c.l.b16 %v1249
        %v1252 = vunpack.c.h.b16 %v1249
        %v1253 = vpack.c.b16 %v1251, %v1251
        %v1254 = vpack.c.b16 %v1252, %v1252
        %v1256 = vshrl.u32 %v1253, 16
        %v1258 = vrot.slane %v1256, 7
        %v1259 = vshll.u32 %v1253, 16
        %v1261 = vor.u32 %v1258, %v1259
        %v1262 = vrot.slane %v1258, 4
        %v1264 = vshrl.u32 %v1254, 16
        %v1266 = vrot.slane %v1264, 7
        %v1267 = vshll.u32 %v1254, 16
        %v1269 = vor.u32 %v1266, %v1267
        %v1270 = vsel %vm295, %v1262, %v1269
        %v1271 = vrot.slane %v1266, 4
        %1272 = vrot.lane.b32.xlu0 %v1261, 127
        %v1273 = vpop.permute.xlu0 %1272
        %1274 = vrot.lane.b32.xlu0 %v1270, 127
        %v1275 = vpop.permute.xlu0 %1274
        %1276 = vrot.lane.b32.xlu0 %v1271, 127
        %v1277 = vpop.permute.xlu0 %1276
        %v1278 = vrot.slane %v1273, 4
        %v1279 = vrot.slane %v1275, 4
        %v1280 = vrot.slane %v1277, 4
        %vm1281 = vcmask 1039360
        %v1282 = vsel %vm1281, %v1278, %v1273
        %v1283 = vsel %vm1281, %v1279, %v1275
        %v1284 = vsel %vm1281, %v1280, %v1277
        %vm1288 = vcmask 1044472
        %vm1289 = vmand %vm1288, %vm323
        %vm1290 = vcmask 121860
        %vm1291 = vsmask.f32 7954
        %vm1292 = vmand %vm1290, %vm1291
        %vm1293 = vmor %vm1292, %vm1289
        %v1294 = vld [vmem:[#allocation2] sm:$0xff]
        %v1295 = vsel %vm1293, %v1282, %v1294
        %1296 = vst [vmem:[#allocation2] sm:$0xff] %v1295
        %vm1297 = vcmask 1044472
        %vm1298 = vcmask 121860
        %vm1299 = vmor %vm1298, %vm1297
        %1300 = vst.msk [vmem:[#allocation2 + $0x8] sm:$0xff] %vm1299, %v1283
        %vm1301 = vcmask 1041400
        %vm1302 = vmand %vm1301, %vm293
        %vm1303 = vcmask 118788
        %vm1304 = vsmask.f32 4352
        %vm1305 = vmand %vm1303, %vm1304
        %vm1306 = vmor %vm1305, %vm1302
        %v1307 = vld [vmem:[#allocation2 + $0x10] sm:$0x11]
        %v1308 = vsel %vm1306, %v1284, %v1307
        %1309 = vst [vmem:[#allocation2 + $0x10] sm:$0x11] %v1308
        %v1310 = vld [vmem:[#allocation2] sm:$0xff]
        %v1311 = vld [vmem:[#allocation2 + $0x8] sm:$0xff]
        %v1312 = vld [vmem:[%s4] sm:$0xf]
        %v1313 = vld [vmem:[%s4 + $0x4] sm:$0xf]
        %v1314 = vld [vmem:[%s4 + $0x8] sm:$0xf]
        %v1315 = vld [vmem:[%s4 + $0xc] sm:$0xf]
        %v1316 = vld [vmem:[%s4 + $0x10] sm:$0xf]
        %v1317 = vld [vmem:[%s4 + $0x14] sm:$0xf]
        %v1318 = vld [vmem:[%s4 + $0x18] sm:$0xf]
        %v1319 = vld [vmem:[%s4 + $0x1c] sm:$0xf]
        %v1320 = vld [vmem:[%s4 + $0x20] sm:$0xf]
        %v1321 = vld [vmem:[%s4 + $0x24] sm:$0xf]
        %v1322 = vld [vmem:[%s4 + $0x28] sm:$0xf]
        %v1323 = vld [vmem:[%s4 + $0x2c] sm:$0xf]
        %v1324 = vld [vmem:[%s4 + $0x30] sm:$0xf]
        %v1325 = vld [vmem:[%s4 + $0x34] sm:$0xf]
        %v1326 = vld [vmem:[%s4 + $0x38] sm:$0xf]
        %v1327 = vld [vmem:[%s4 + $0x3c] sm:$0xf]
        %v1328 = vld [vmem:[%s4 + $0x40] sm:$0xf]
        %v1329 = vld [vmem:[%s4 + $0x44] sm:$0xf]
        %v1330 = vld [vmem:[#allocation2 + $0x10] sm:$0x11]
        %s1331 = scalar_lea.vmem %s4, 72
        %v1332 = vld [vmem:[%s1331] sm:$0xf]
        %v1333 = vld [vmem:[%s1331 + $0x4] sm:$0xf]
        %v1334 = vld [vmem:[%s1331 + $0x8] sm:$0xf]
        %v1335 = vld [vmem:[%s1331 + $0xc] sm:$0xf]
        %v1336 = vld [vmem:[%s1331 + $0x10] sm:$0xf]
        %v1337 = vld [vmem:[%s1331 + $0x14] sm:$0xf]
        %v1338 = vld [vmem:[%s1331 + $0x18] sm:$0xf]
        %v1339 = vld [vmem:[%s1331 + $0x1c] sm:$0xf]
        %v1340 = vld [vmem:[%s1331 + $0x20] sm:$0xf]
        %v1341 = vld [vmem:[%s1331 + $0x24] sm:$0xf]
        %v1342 = vld [vmem:[%s1331 + $0x28] sm:$0xf]
        %v1343 = vld [vmem:[%s1331 + $0x2c] sm:$0xf]
        %v1344 = vld [vmem:[%s1331 + $0x30] sm:$0xf]
        %v1345 = vld [vmem:[%s1331 + $0x34] sm:$0xf]
        %v1346 = vld [vmem:[%s1331 + $0x38] sm:$0xf]
        %v1347 = vld [vmem:[%s1331 + $0x3c] sm:$0xf]
        %v1348 = vld [vmem:[%s1331 + $0x40] sm:$0xf]
        %v1349 = vld [vmem:[%s1331 + $0x44] sm:$0xf]
        %v1353 = vunpack.c.l.b16 %v1310
        %v1354 = vunpack.c.h.b16 %v1310
        %v1355 = vunpack.c.l.b16 %v1311
        %v1356 = vunpack.c.h.b16 %v1311
        %v1357 = vunpack.c.l.b16 %v1330
        %v1358 = vunpack.c.h.b16 %v1330
        %v1359 = vpack.c.b16 %v1355, %v1353
        %v1360 = vpack.c.b16 %v1356, %v1354
        %v1361 = vpack.c.b16 %v1357, %v1357
        %v1362 = vpack.c.b16 %v1358, %v1358
        %vm1363 = vsmask.f32 7424
        %v1365 = vshrl.u32 %v1359, 16
        %v1367 = vshll.u32 %v1359, 16
        %v1369 = vrot.slane %v1367, 1
        %v1370 = vor.u32 %v1365, %v1369
        %v1372 = vshll.u32 %v1361, 16
        %v1374 = vrot.slane %v1372, 1
        %v1375 = vsel %vm1363, %v1370, %v1374
        %v1377 = vshrl.u32 %v1360, 16
        %v1379 = vshll.u32 %v1360, 16
        %v1381 = vrot.slane %v1379, 1
        %v1382 = vor.u32 %v1377, %v1381
        %v1384 = vshll.u32 %v1362, 16
        %v1386 = vrot.slane %v1384, 1
        %v1387 = vsel %vm1363, %v1382, %v1386
        %v1407 = vunpack.c.l.b16 %v1332
        %v1408 = vunpack.c.l.b16 %v1333
        %v1409 = vunpack.c.l.b16 %v1334
        %v1410 = vunpack.c.l.b16 %v1335
        %v1411 = vunpack.c.l.b16 %v1336
        %v1412 = vunpack.c.l.b16 %v1337
        %v1413 = vunpack.c.l.b16 %v1338
        %v1414 = vunpack.c.l.b16 %v1339
        %v1415 = vunpack.c.l.b16 %v1340
        %v1416 = vunpack.c.l.b16 %v1341
        %v1417 = vunpack.c.l.b16 %v1342
        %v1418 = vunpack.c.l.b16 %v1343
        %v1419 = vunpack.c.l.b16 %v1344
        %v1420 = vunpack.c.l.b16 %v1345
        %v1421 = vunpack.c.l.b16 %v1346
        %v1422 = vunpack.c.l.b16 %v1347
        %v1423 = vunpack.c.l.b16 %v1348
        %v1424 = vunpack.c.l.b16 %v1349
        %v1425 = vpack.c.b16 %v1408, %v1407
        %v1426 = vpack.c.b16 %v1410, %v1409
        %v1427 = vpack.c.b16 %v1412, %v1411
        %v1428 = vpack.c.b16 %v1414, %v1413
        %v1429 = vpack.c.b16 %v1416, %v1415
        %v1430 = vpack.c.b16 %v1418, %v1417
        %v1431 = vpack.c.b16 %v1420, %v1419
        %v1432 = vpack.c.b16 %v1422, %v1421
        %v1433 = vpack.c.b16 %v1424, %v1423
        %vm1443 = vcmask 130048
        %v1445 = vsel %vm1443, %v1387, 0
        %1447 = vmatprep.subr.bf16.mxu0 0
        %1448 = vmatpush1.bf16.msra.mxu0 %v1432
        %1449 = vmatprep.subr.bf16.mxu0 0
        %1450 = vmatpush1.bf16.msra.mxu0 %v1431
        %1451 = vmatprep.subr.bf16.mxu0 0
        %1452 = vmatpush1.bf16.msra.mxu0 %v1430
        %1453 = vmatprep.subr.bf16.mxu0 0
        %1454 = vmatpush1.bf16.msra.mxu0 %v1429
        %1455 = vmatprep.subr.bf16.mxu0 0
        %1456 = vmatpush1.bf16.msra.mxu0 %v1428
        %1457 = vmatprep.subr.bf16.mxu0 0
        %1458 = vmatpush1.bf16.msra.mxu0 %v1427
        %1459 = vmatprep.subr.bf16.mxu0 0
        %1460 = vmatpush1.bf16.msra.mxu0 %v1426
        %1461 = vmatprep.subr.bf16.mxu0 0
        %1462 = vmatpush1.bf16.msra.mxu0 %v1425
        %1463 = vmatprep.subr.bf16.mxu0 0
        %1464 = vmatpush2.bf16.msra.mxu0 0
        %1465 = vmatprep.subr.bf16.mxu0 0
        %1466 = vmatpush2.bf16.msra.mxu0 0
        %1467 = vmatprep.subr.bf16.mxu0 0
        %1468 = vmatpush2.bf16.msra.mxu0 0
        %1469 = vmatprep.subr.bf16.mxu0 0
        %1470 = vmatpush2.bf16.msra.mxu0 0
        %1471 = vmatprep.subr.bf16.mxu0 0
        %1472 = vmatpush2.bf16.msra.mxu0 0
        %1473 = vmatprep.subr.bf16.mxu0 0
        %1474 = vmatpush2.bf16.msra.mxu0 0
        %1475 = vmatprep.subr.bf16.mxu0 0
        %1476 = vmatpush2.bf16.msra.mxu0 0
        %1477 = vmatprep.subr.bf16.mxu0 0
        %1478 = vmatpush2.bf16.msra.mxu0 %v1433
        %1479 = vmatprep.mubr.bf16.mxu0 %v1445
        %1480 = vmatmul.mubr.bf16.gmra.mxu0 %v1375
        %v1481 = vpop.f32.mrf.mxu0
        %v1482 = vadd.f32 0.0, %v1481
        %v1483 = vpop.f32.mrf.mxu0
        %v1484 = vpop.f32.mrf.mxu0
        %v1485 = vadd.f32 0.0, %v1484
        %v1486 = vpop.f32.mrf.mxu0
        %1487 = vdwg.mxu0
        %v1507 = vunpack.c.l.b16 %v1312
        %v1508 = vunpack.c.l.b16 %v1313
        %v1509 = vunpack.c.l.b16 %v1314
        %v1510 = vunpack.c.l.b16 %v1315
        %v1511 = vunpack.c.l.b16 %v1316
        %v1512 = vunpack.c.l.b16 %v1317
        %v1513 = vunpack.c.l.b16 %v1318
        %v1514 = vunpack.c.l.b16 %v1319
        %v1515 = vunpack.c.l.b16 %v1320
        %v1516 = vunpack.c.l.b16 %v1321
        %v1517 = vunpack.c.l.b16 %v1322
        %v1518 = vunpack.c.l.b16 %v1323
        %v1519 = vunpack.c.l.b16 %v1324
        %v1520 = vunpack.c.l.b16 %v1325
        %v1521 = vunpack.c.l.b16 %v1326
        %v1522 = vunpack.c.l.b16 %v1327
        %v1523 = vunpack.c.l.b16 %v1328
        %v1524 = vunpack.c.l.b16 %v1329
        %v1525 = vpack.c.b16 %v1508, %v1507
        %v1526 = vpack.c.b16 %v1510, %v1509
        %v1527 = vpack.c.b16 %v1512, %v1511
        %v1528 = vpack.c.b16 %v1514, %v1513
        %v1529 = vpack.c.b16 %v1516, %v1515
        %v1530 = vpack.c.b16 %v1518, %v1517
        %v1531 = vpack.c.b16 %v1520, %v1519
        %v1532 = vpack.c.b16 %v1522, %v1521
        %v1533 = vpack.c.b16 %v1524, %v1523
        %v1543 = vsel %vm1443, %v1360, 0
        %1545 = vmatprep.subr.bf16.mxu0 0
        %1546 = vmatpush1.bf16.msra.mxu0 %v1532
        %1547 = vmatprep.subr.bf16.mxu0 0
        %1548 = vmatpush1.bf16.msra.mxu0 %v1531
        %1549 = vmatprep.subr.bf16.mxu0 0
        %1550 = vmatpush1.bf16.msra.mxu0 %v1530
        %1551 = vmatprep.subr.bf16.mxu0 0
        %1552 = vmatpush1.bf16.msra.mxu0 %v1529
        %1553 = vmatprep.subr.bf16.mxu0 0
        %1554 = vmatpush1.bf16.msra.mxu0 %v1528
        %1555 = vmatprep.subr.bf16.mxu0 0
        %1556 = vmatpush1.bf16.msra.mxu0 %v1527
        %1557 = vmatprep.subr.bf16.mxu0 0
        %1558 = vmatpush1.bf16.msra.mxu0 %v1526
        %1559 = vmatprep.subr.bf16.mxu0 0
        %1560 = vmatpush1.bf16.msra.mxu0 %v1525
        %1561 = vmatprep.subr.bf16.mxu0 0
        %1562 = vmatpush2.bf16.msra.mxu0 0
        %1563 = vmatprep.subr.bf16.mxu0 0
        %1564 = vmatpush2.bf16.msra.mxu0 0
        %1565 = vmatprep.subr.bf16.mxu0 0
        %1566 = vmatpush2.bf16.msra.mxu0 0
        %1567 = vmatprep.subr.bf16.mxu0 0
        %1568 = vmatpush2.bf16.msra.mxu0 0
        %1569 = vmatprep.subr.bf16.mxu0 0
        %1570 = vmatpush2.bf16.msra.mxu0 0
        %1571 = vmatprep.subr.bf16.mxu0 0
        %1572 = vmatpush2.bf16.msra.mxu0 0
        %1573 = vmatprep.subr.bf16.mxu0 0
        %1574 = vmatpush2.bf16.msra.mxu0 0
        %1575 = vmatprep.subr.bf16.mxu0 0
        %1576 = vmatpush2.bf16.msra.mxu0 %v1533
        %1577 = vmatprep.mubr.bf16.mxu0 %v1543
        %1578 = vmatmul.mubr.bf16.gmra.mxu0 %v1359
        %v1579 = vpop.f32.mrf.mxu0
        %v1580 = vadd.f32 %v1482, %v1579
        %v1581 = vpop.f32.mrf.mxu0
        %v1582 = vpop.f32.mrf.mxu0
        %v1583 = vadd.f32 %v1485, %v1582
        %v1584 = vpop.f32.mrf.mxu0
        %1585 = vdwg.mxu0
        %v1586 = vld [vmem:[#allocation2] sm:$0xee]
        %s1587 = scalar_lea.vmem %s4, 144
        %v1588 = vld [vmem:[%s1587] sm:$0xf]
        %v1589 = vld [vmem:[%s1587 + $0x4] sm:$0xf]
        %v1590 = vld [vmem:[%s1587 + $0x8] sm:$0xf]
        %v1591 = vld [vmem:[%s1587 + $0xc] sm:$0xf]
        %v1592 = vld [vmem:[%s1587 + $0x10] sm:$0xf]
        %v1593 = vld [vmem:[%s1587 + $0x14] sm:$0xf]
        %v1594 = vld [vmem:[%s1587 + $0x18] sm:$0xf]
        %v1595 = vld [vmem:[%s1587 + $0x1c] sm:$0xf]
        %v1596 = vld [vmem:[%s1587 + $0x20] sm:$0xf]
        %v1597 = vld [vmem:[%s1587 + $0x24] sm:$0xf]
        %v1598 = vld [vmem:[%s1587 + $0x28] sm:$0xf]
        %v1599 = vld [vmem:[%s1587 + $0x2c] sm:$0xf]
        %v1600 = vld [vmem:[%s1587 + $0x30] sm:$0xf]
        %v1601 = vld [vmem:[%s1587 + $0x34] sm:$0xf]
        %v1602 = vld [vmem:[%s1587 + $0x38] sm:$0xf]
        %v1603 = vld [vmem:[%s1587 + $0x3c] sm:$0xf]
        %v1604 = vld [vmem:[%s1587 + $0x40] sm:$0xf]
        %v1605 = vld [vmem:[%s1587 + $0x44] sm:$0xf]
        %v1607 = vunpack.c.l.b16 %v1586
        %v1608 = vunpack.c.h.b16 %v1586
        %v1609 = vpack.c.b16 %v1355, %v1607
        %v1610 = vpack.c.b16 %v1356, %v1608
        %vm1611 = vcmask 1046528
        %v1612 = vrot.slane %v1609, 1
        %v1613 = vrot.slane %v1361, 1
        %v1614 = vsel %vm1611, %v1612, %v1613
        %v1615 = vrot.slane %v1610, 1
        %v1616 = vrot.slane %v1362, 1
        %v1617 = vsel %vm1611, %v1615, %v1616
        %v1637 = vunpack.c.l.b16 %v1588
        %v1638 = vunpack.c.l.b16 %v1589
        %v1639 = vunpack.c.l.b16 %v1590
        %v1640 = vunpack.c.l.b16 %v1591
        %v1641 = vunpack.c.l.b16 %v1592
        %v1642 = vunpack.c.l.b16 %v1593
        %v1643 = vunpack.c.l.b16 %v1594
        %v1644 = vunpack.c.l.b16 %v1595
        %v1645 = vunpack.c.l.b16 %v1596
        %v1646 = vunpack.c.l.b16 %v1597
        %v1647 = vunpack.c.l.b16 %v1598
        %v1648 = vunpack.c.l.b16 %v1599
        %v1649 = vunpack.c.l.b16 %v1600
        %v1650 = vunpack.c.l.b16 %v1601
        %v1651 = vunpack.c.l.b16 %v1602
        %v1652 = vunpack.c.l.b16 %v1603
        %v1653 = vunpack.c.l.b16 %v1604
        %v1654 = vunpack.c.l.b16 %v1605
        %v1655 = vpack.c.b16 %v1638, %v1637
        %v1656 = vpack.c.b16 %v1640, %v1639
        %v1657 = vpack.c.b16 %v1642, %v1641
        %v1658 = vpack.c.b16 %v1644, %v1643
        %v1659 = vpack.c.b16 %v1646, %v1645
        %v1660 = vpack.c.b16 %v1648, %v1647
        %v1661 = vpack.c.b16 %v1650, %v1649
        %v1662 = vpack.c.b16 %v1652, %v1651
        %v1663 = vpack.c.b16 %v1654, %v1653
        %v1674 = vsel %vm1443, %v1617, 0
        %1676 = vmatprep.subr.bf16.mxu0 0
        %1677 = vmatpush1.bf16.msra.mxu0 %v1662
        %1678 = vmatprep.subr.bf16.mxu0 0
        %1679 = vmatpush1.bf16.msra.mxu0 %v1661
        %1680 = vmatprep.subr.bf16.mxu0 0
        %1681 = vmatpush1.bf16.msra.mxu0 %v1660
        %1682 = vmatprep.subr.bf16.mxu0 0
        %1683 = vmatpush1.bf16.msra.mxu0 %v1659
        %1684 = vmatprep.subr.bf16.mxu0 0
        %1685 = vmatpush1.bf16.msra.mxu0 %v1658
        %1686 = vmatprep.subr.bf16.mxu0 0
        %1687 = vmatpush1.bf16.msra.mxu0 %v1657
        %1688 = vmatprep.subr.bf16.mxu0 0
        %1689 = vmatpush1.bf16.msra.mxu0 %v1656
        %1690 = vmatprep.subr.bf16.mxu0 0
        %1691 = vmatpush1.bf16.msra.mxu0 %v1655
        %1692 = vmatprep.subr.bf16.mxu0 0
        %1693 = vmatpush2.bf16.msra.mxu0 0
        %1694 = vmatprep.subr.bf16.mxu0 0
        %1695 = vmatpush2.bf16.msra.mxu0 0
        %1696 = vmatprep.subr.bf16.mxu0 0
        %1697 = vmatpush2.bf16.msra.mxu0 0
        %1698 = vmatprep.subr.bf16.mxu0 0
        %1699 = vmatpush2.bf16.msra.mxu0 0
        %1700 = vmatprep.subr.bf16.mxu0 0
        %1701 = vmatpush2.bf16.msra.mxu0 0
        %1702 = vmatprep.subr.bf16.mxu0 0
        %1703 = vmatpush2.bf16.msra.mxu0 0
        %1704 = vmatprep.subr.bf16.mxu0 0
        %1705 = vmatpush2.bf16.msra.mxu0 0
        %1706 = vmatprep.subr.bf16.mxu0 0
        %1707 = vmatpush2.bf16.msra.mxu0 %v1663
        %1708 = vmatprep.mubr.bf16.mxu0 %v1674
        %1709 = vmatmul.mubr.bf16.gmra.mxu0 %v1614
        %v1710 = vpop.f32.mrf.mxu0
        %v1711 = vadd.f32 0.0, %v1710
        %v1712 = vpop.f32.mrf.mxu0
        %v1713 = vpop.f32.mrf.mxu0
        %v1714 = vadd.f32 0.0, %v1713
        %v1715 = vpop.f32.mrf.mxu0
        %1716 = vdwg.mxu0
        %v1717 = vadd.f32 %v1580, %v1711
        %v1718 = vadd.f32 %v1583, %v1714
        %v1719 = vmax.f32 %v1717, 0.0
        %v1720 = vmax.f32 %v1718, 0.0
        %v1721 = vpack.c.bf16 %v1720, %v1719
        %v1723 = vunpack.c.l.b16 %v1721
        %v1724 = vunpack.c.h.b16 %v1721
        %v1725 = vpack.c.b16 %v1723, %v1723
        %v1726 = vpack.c.b16 %v1724, %v1724
        %v1728 = vshrl.u32 %v1725, 16
        %v1730 = vrot.slane %v1728, 7
        %v1731 = vshll.u32 %v1725, 16
        %v1733 = vor.u32 %v1730, %v1731
        %v1734 = vrot.slane %v1730, 4
        %v1736 = vshrl.u32 %v1726, 16
        %v1738 = vrot.slane %v1736, 7
        %v1739 = vshll.u32 %v1726, 16
        %v1741 = vor.u32 %v1738, %v1739
        %v1742 = vsel %vm295, %v1734, %v1741
        %v1743 = vrot.slane %v1738, 4
        %1744 = vrot.lane.b32.xlu0 %v1733, 1
        %v1745 = vpop.permute.xlu0 %1744
        %1746 = vrot.lane.b32.xlu0 %v1742, 1
        %v1747 = vpop.permute.xlu0 %1746
        %1748 = vrot.lane.b32.xlu0 %v1743, 1
        %v1749 = vpop.permute.xlu0 %1748
        %v1753 = vld [vmem:[#allocation3] sm:$0xf]
        %v1754 = vsel %vm324, %v1745, %v1753
        %1755 = vst [vmem:[#allocation3] sm:$0xf] %v1754
        %1756 = vst.msk [vmem:[#allocation3 + $0x4] sm:$0xf] %vm328, %v1747
        %v1757 = vld [vmem:[#allocation3 + $0x8] sm:$0x1]
        %v1758 = vsel %vm331, %v1749, %v1757
        %1759 = vst [vmem:[#allocation3 + $0x8] sm:$0x1] %v1758
        %1760 = vrot.lane.b32.xlu0 %v1733, 3
        %v1761 = vpop.permute.xlu0 %1760
        %1762 = vrot.lane.b32.xlu0 %v1742, 3
        %v1763 = vpop.permute.xlu0 %1762
        %1764 = vrot.lane.b32.xlu0 %v1743, 3
        %v1765 = vpop.permute.xlu0 %1764
        %v1769 = vld [vmem:[#allocation3] sm:$0xf]
        %v1770 = vsel %vm371, %v1761, %v1769
        %1771 = vst [vmem:[#allocation3] sm:$0xf] %v1770
        %1772 = vst.msk [vmem:[#allocation3 + $0x4] sm:$0xf] %vm375, %v1763
        %v1773 = vld [vmem:[#allocation3 + $0x8] sm:$0x1]
        %v1774 = vsel %vm378, %v1765, %v1773
        %1775 = vst [vmem:[#allocation3 + $0x8] sm:$0x1] %v1774
        %1776 = vrot.lane.b32.xlu0 %v1733, 5
        %v1777 = vpop.permute.xlu0 %1776
        %1778 = vrot.lane.b32.xlu0 %v1742, 5
        %v1779 = vpop.permute.xlu0 %1778
        %1780 = vrot.lane.b32.xlu0 %v1743, 5
        %v1781 = vpop.permute.xlu0 %1780
        %v1785 = vld [vmem:[#allocation3] sm:$0xf]
        %v1786 = vsel %vm418, %v1777, %v1785
        %1787 = vst [vmem:[#allocation3] sm:$0xf] %v1786
        %1788 = vst.msk [vmem:[#allocation3 + $0x4] sm:$0xf] %vm422, %v1779
        %v1789 = vld [vmem:[#allocation3 + $0x8] sm:$0x1]
        %v1790 = vsel %vm425, %v1781, %v1789
        %1791 = vst [vmem:[#allocation3 + $0x8] sm:$0x1] %v1790
        %1792 = vrot.lane.b32.xlu0 %v1733, 7
        %v1793 = vpop.permute.xlu0 %1792
        %1794 = vrot.lane.b32.xlu0 %v1742, 7
        %v1795 = vpop.permute.xlu0 %1794
        %1796 = vrot.lane.b32.xlu0 %v1743, 7
        %v1797 = vpop.permute.xlu0 %1796
        %v1801 = vld [vmem:[#allocation3] sm:$0xf]
        %v1802 = vsel %vm465, %v1793, %v1801
        %1803 = vst [vmem:[#allocation3] sm:$0xf] %v1802
        %1804 = vst.msk [vmem:[#allocation3 + $0x4] sm:$0xf] %vm469, %v1795
        %v1805 = vld [vmem:[#allocation3 + $0x8] sm:$0x1]
        %v1806 = vsel %vm472, %v1797, %v1805
        %1807 = vst [vmem:[#allocation3 + $0x8] sm:$0x1] %v1806
        %v1808 = vld [vmem:[#allocation3] sm:$0xf]
        %v1809 = vld [vmem:[#allocation3 + $0x4] sm:$0xf]
        %v1810 = vld [vmem:[%s5] sm:$0xf]
        %v1811 = vld [vmem:[%s5 + $0x4] sm:$0xf]
        %v1812 = vld [vmem:[%s5 + $0x8] sm:$0xf]
        %v1813 = vld [vmem:[%s5 + $0xc] sm:$0xf]
        %v1814 = vld [vmem:[%s5 + $0x10] sm:$0xf]
        %v1815 = vld [vmem:[%s5 + $0x14] sm:$0xf]
        %v1816 = vld [vmem:[%s5 + $0x18] sm:$0xf]
        %v1817 = vld [vmem:[%s5 + $0x1c] sm:$0xf]
        %v1818 = vld [vmem:[%s5 + $0x20] sm:$0xf]
        %v1819 = vld [vmem:[#allocation3 + $0x8] sm:$0x1]
        %s1820 = scalar_lea.vmem %s5, 36
        %v1821 = vld [vmem:[%s1820] sm:$0xf]
        %v1822 = vld [vmem:[%s1820 + $0x4] sm:$0xf]
        %v1823 = vld [vmem:[%s1820 + $0x8] sm:$0xf]
        %v1824 = vld [vmem:[%s1820 + $0xc] sm:$0xf]
        %v1825 = vld [vmem:[%s1820 + $0x10] sm:$0xf]
        %v1826 = vld [vmem:[%s1820 + $0x14] sm:$0xf]
        %v1827 = vld [vmem:[%s1820 + $0x18] sm:$0xf]
        %v1828 = vld [vmem:[%s1820 + $0x1c] sm:$0xf]
        %v1829 = vld [vmem:[%s1820 + $0x20] sm:$0xf]
        %v1833 = vunpack.c.l.b16 %v1808
        %v1834 = vunpack.c.l.b16 %v1809
        %v1835 = vunpack.c.l.b16 %v1819
        %v1836 = vpack.c.b16 %v1834, %v1833
        %v1837 = vpack.c.b16 %v1835, %v1835
        %v1839 = vshrl.u32 %v1836, 16
        %v1841 = vshll.u32 %v1836, 16
        %v1843 = vrot.slane %v1841, 1
        %v1844 = vor.u32 %v1839, %v1843
        %v1846 = vshll.u32 %v1837, 16
        %v1848 = vrot.slane %v1846, 1
        %v1849 = vsel %vm1363, %v1844, %v1848
        %v1859 = vunpack.c.l.b16 %v1821
        %v1860 = vunpack.c.l.b16 %v1822
        %v1861 = vunpack.c.l.b16 %v1823
        %v1862 = vunpack.c.l.b16 %v1824
        %v1863 = vunpack.c.l.b16 %v1825
        %v1864 = vunpack.c.l.b16 %v1826
        %v1865 = vunpack.c.l.b16 %v1827
        %v1866 = vunpack.c.l.b16 %v1828
        %v1867 = vunpack.c.l.b16 %v1829
        %v1868 = vpack.c.b16 %v1860, %v1859
        %v1869 = vpack.c.b16 %v1862, %v1861
        %v1870 = vpack.c.b16 %v1864, %v1863
        %v1871 = vpack.c.b16 %v1866, %v1865
        %v1872 = vpack.c.b16 %v1867, %v1867
        %vm1877 = vcmask 588800
        %v1879 = vsel %vm1877, %v1849, 0
        %v1882 = vsel %vm271, %v1872, 0
        %1884 = vmatprep.subr.bf16.mxu0 0
        %1885 = vmatpush1.bf16.msra.mxu0 0
        %1886 = vmatprep.subr.bf16.mxu0 0
        %1887 = vmatpush1.bf16.msra.mxu0 0
        %1888 = vmatprep.subr.bf16.mxu0 0
        %1889 = vmatpush1.bf16.msra.mxu0 0
        %1890 = vmatprep.subr.bf16.mxu0 0
        %1891 = vmatpush1.bf16.msra.mxu0 %v1882
        %1892 = vmatprep.subr.bf16.mxu0 0
        %1893 = vmatpush1.bf16.msra.mxu0 %v1871
        %1894 = vmatprep.subr.bf16.mxu0 0
        %1895 = vmatpush1.bf16.msra.mxu0 %v1870
        %1896 = vmatprep.subr.bf16.mxu0 0
        %1897 = vmatpush1.bf16.msra.mxu0 %v1869
        %1898 = vmatprep.subr.bf16.mxu0 0
        %1899 = vmatpush1.bf16.msra.mxu0 %v1868
        %1900 = vmatprep.subr.bf16.mxu0 0
        %1901 = vmatpush2.bf16.msra.mxu0 0
        %1902 = vmatprep.subr.bf16.mxu0 0
        %1903 = vmatpush2.bf16.msra.mxu0 0
        %1904 = vmatprep.subr.bf16.mxu0 0
        %1905 = vmatpush2.bf16.msra.mxu0 0
        %1906 = vmatprep.subr.bf16.mxu0 0
        %1907 = vmatpush2.bf16.msra.mxu0 0
        %1908 = vmatprep.subr.bf16.mxu0 0
        %1909 = vmatpush2.bf16.msra.mxu0 0
        %1910 = vmatprep.subr.bf16.mxu0 0
        %1911 = vmatpush2.bf16.msra.mxu0 0
        %1912 = vmatprep.subr.bf16.mxu0 0
        %1913 = vmatpush2.bf16.msra.mxu0 0
        %1914 = vmatprep.subr.bf16.mxu0 0
        %1915 = vmatpush2.bf16.msra.mxu0 0
        %1916 = vmatprep.mubr.bf16.mxu0 0
        %1917 = vmatmul.mubr.bf16.gmra.mxu0 %v1879
        %v1918 = vpop.f32.mrf.mxu0
        %v1919 = vadd.f32 0.0, %v1918
        %v1920 = vpop.f32.mrf.mxu0
        %v1921 = vpop.f32.mrf.mxu0
        %v1922 = vadd.f32 0.0, %v1921
        %v1923 = vpop.f32.mrf.mxu0
        %1924 = vdwg.mxu0
        %v1934 = vunpack.c.l.b16 %v1810
        %v1935 = vunpack.c.l.b16 %v1811
        %v1936 = vunpack.c.l.b16 %v1812
        %v1937 = vunpack.c.l.b16 %v1813
        %v1938 = vunpack.c.l.b16 %v1814
        %v1939 = vunpack.c.l.b16 %v1815
        %v1940 = vunpack.c.l.b16 %v1816
        %v1941 = vunpack.c.l.b16 %v1817
        %v1942 = vunpack.c.l.b16 %v1818
        %v1943 = vpack.c.b16 %v1935, %v1934
        %v1944 = vpack.c.b16 %v1937, %v1936
        %v1945 = vpack.c.b16 %v1939, %v1938
        %v1946 = vpack.c.b16 %v1941, %v1940
        %v1947 = vpack.c.b16 %v1942, %v1942
        %v1952 = vsel %vm1877, %v1836, 0
        %v1955 = vsel %vm271, %v1947, 0
        %1957 = vmatprep.subr.bf16.mxu0 0
        %1958 = vmatpush1.bf16.msra.mxu0 0
        %1959 = vmatprep.subr.bf16.mxu0 0
        %1960 = vmatpush1.bf16.msra.mxu0 0
        %1961 = vmatprep.subr.bf16.mxu0 0
        %1962 = vmatpush1.bf16.msra.mxu0 0
        %1963 = vmatprep.subr.bf16.mxu0 0
        %1964 = vmatpush1.bf16.msra.mxu0 %v1955
        %1965 = vmatprep.subr.bf16.mxu0 0
        %1966 = vmatpush1.bf16.msra.mxu0 %v1946
        %1967 = vmatprep.subr.bf16.mxu0 0
        %1968 = vmatpush1.bf16.msra.mxu0 %v1945
        %1969 = vmatprep.subr.bf16.mxu0 0
        %1970 = vmatpush1.bf16.msra.mxu0 %v1944
        %1971 = vmatprep.subr.bf16.mxu0 0
        %1972 = vmatpush1.bf16.msra.mxu0 %v1943
        %1973 = vmatprep.subr.bf16.mxu0 0
        %1974 = vmatpush2.bf16.msra.mxu0 0
        %1975 = vmatprep.subr.bf16.mxu0 0
        %1976 = vmatpush2.bf16.msra.mxu0 0
        %1977 = vmatprep.subr.bf16.mxu0 0
        %1978 = vmatpush2.bf16.msra.mxu0 0
        %1979 = vmatprep.subr.bf16.mxu0 0
        %1980 = vmatpush2.bf16.msra.mxu0 0
        %1981 = vmatprep.subr.bf16.mxu0 0
        %1982 = vmatpush2.bf16.msra.mxu0 0
        %1983 = vmatprep.subr.bf16.mxu0 0
        %1984 = vmatpush2.bf16.msra.mxu0 0
        %1985 = vmatprep.subr.bf16.mxu0 0
        %1986 = vmatpush2.bf16.msra.mxu0 0
        %1987 = vmatprep.subr.bf16.mxu0 0
        %1988 = vmatpush2.bf16.msra.mxu0 0
        %1989 = vmatprep.mubr.bf16.mxu0 0
        %1990 = vmatmul.mubr.bf16.gmra.mxu0 %v1952
        %v1991 = vpop.f32.mrf.mxu0
        %v1992 = vadd.f32 %v1919, %v1991
        %v1993 = vpop.f32.mrf.mxu0
        %v1994 = vpop.f32.mrf.mxu0
        %v1995 = vadd.f32 %v1922, %v1994
        %v1996 = vpop.f32.mrf.mxu0
        %1997 = vdwg.mxu0
        %v1998 = vld [vmem:[#allocation3] sm:$0xe]
        %s1999 = scalar_lea.vmem %s5, 72
        %v2000 = vld [vmem:[%s1999] sm:$0xf]
        %v2001 = vld [vmem:[%s1999 + $0x4] sm:$0xf]
        %v2002 = vld [vmem:[%s1999 + $0x8] sm:$0xf]
        %v2003 = vld [vmem:[%s1999 + $0xc] sm:$0xf]
        %v2004 = vld [vmem:[%s1999 + $0x10] sm:$0xf]
        %v2005 = vld [vmem:[%s1999 + $0x14] sm:$0xf]
        %v2006 = vld [vmem:[%s1999 + $0x18] sm:$0xf]
        %v2007 = vld [vmem:[%s1999 + $0x1c] sm:$0xf]
        %v2008 = vld [vmem:[%s1999 + $0x20] sm:$0xf]
        %v2010 = vunpack.c.l.b16 %v1998
        %v2011 = vpack.c.b16 %v1834, %v2010
        %v2012 = vrot.slane %v2011, 1
        %v2013 = vrot.slane %v1837, 1
        %v2014 = vsel %vm1611, %v2012, %v2013
        %v2024 = vunpack.c.l.b16 %v2000
        %v2025 = vunpack.c.l.b16 %v2001
        %v2026 = vunpack.c.l.b16 %v2002
        %v2027 = vunpack.c.l.b16 %v2003
        %v2028 = vunpack.c.l.b16 %v2004
        %v2029 = vunpack.c.l.b16 %v2005
        %v2030 = vunpack.c.l.b16 %v2006
        %v2031 = vunpack.c.l.b16 %v2007
        %v2032 = vunpack.c.l.b16 %v2008
        %v2033 = vpack.c.b16 %v2025, %v2024
        %v2034 = vpack.c.b16 %v2027, %v2026
        %v2035 = vpack.c.b16 %v2029, %v2028
        %v2036 = vpack.c.b16 %v2031, %v2030
        %v2037 = vpack.c.b16 %v2032, %v2032
        %v2043 = vsel %vm1877, %v2014, 0
        %v2046 = vsel %vm271, %v2037, 0
        %2048 = vmatprep.subr.bf16.mxu0 0
        %2049 = vmatpush1.bf16.msra.mxu0 0
        %2050 = vmatprep.subr.bf16.mxu0 0
        %2051 = vmatpush1.bf16.msra.mxu0 0
        %2052 = vmatprep.subr.bf16.mxu0 0
        %2053 = vmatpush1.bf16.msra.mxu0 0
        %2054 = vmatprep.subr.bf16.mxu0 0
        %2055 = vmatpush1.bf16.msra.mxu0 %v2046
        %2056 = vmatprep.subr.bf16.mxu0 0
        %2057 = vmatpush1.bf16.msra.mxu0 %v2036
        %2058 = vmatprep.subr.bf16.mxu0 0
        %2059 = vmatpush1.bf16.msra.mxu0 %v2035
        %2060 = vmatprep.subr.bf16.mxu0 0
        %2061 = vmatpush1.bf16.msra.mxu0 %v2034
        %2062 = vmatprep.subr.bf16.mxu0 0
        %2063 = vmatpush1.bf16.msra.mxu0 %v2033
        %2064 = vmatprep.subr.bf16.mxu0 0
        %2065 = vmatpush2.bf16.msra.mxu0 0
        %2066 = vmatprep.subr.bf16.mxu0 0
        %2067 = vmatpush2.bf16.msra.mxu0 0
        %2068 = vmatprep.subr.bf16.mxu0 0
        %2069 = vmatpush2.bf16.msra.mxu0 0
        %2070 = vmatprep.subr.bf16.mxu0 0
        %2071 = vmatpush2.bf16.msra.mxu0 0
        %2072 = vmatprep.subr.bf16.mxu0 0
        %2073 = vmatpush2.bf16.msra.mxu0 0
        %2074 = vmatprep.subr.bf16.mxu0 0
        %2075 = vmatpush2.bf16.msra.mxu0 0
        %2076 = vmatprep.subr.bf16.mxu0 0
        %2077 = vmatpush2.bf16.msra.mxu0 0
        %2078 = vmatprep.subr.bf16.mxu0 0
        %2079 = vmatpush2.bf16.msra.mxu0 0
        %2080 = vmatprep.mubr.bf16.mxu0 0
        %2081 = vmatmul.mubr.bf16.gmra.mxu0 %v2043
        %v2082 = vpop.f32.mrf.mxu0
        %v2083 = vadd.f32 0.0, %v2082
        %v2084 = vpop.f32.mrf.mxu0
        %v2085 = vpop.f32.mrf.mxu0
        %v2086 = vadd.f32 0.0, %v2085
        %v2087 = vpop.f32.mrf.mxu0
        %2088 = vdwg.mxu0
        %v2089 = vadd.f32 %v1992, %v2083
        %v2090 = vadd.f32 %v1995, %v2086
        %v2091 = vmax.f32 %v2089, 0.0
        %v2092 = vmax.f32 %v2090, 0.0
        %2093 = vst.msk [vmem:[%s259] sm:$0xff] %vm1443, %v2091
        %2094 = vst.msk [vmem:[%s259 + $0x8] sm:$0xff] %vm1443, %v2092
        %2097 = vrot.lane.b32.xlu0 %v2091, 112
        %v2098 = vpop.permute.xlu0 %2097
        %2099 = vrot.lane.b32.xlu0 %v2092, 112
        %v2100 = vpop.permute.xlu0 %2099
        %s2103 = scalar_lea.vmem %s259, 16 [#allocation4]
        %2104 = vst.msk [vmem:[%s2103] sm:$0xff] %vm1443, %v2098
        %2105 = vst.msk [vmem:[%s2103 + $0x8] sm:$0xff] %vm1443, %v2100
        %2106 = vrot.lane.b32.xlu0 %v2091, 96
        %v2107 = vpop.permute.xlu0 %2106
        %2108 = vrot.lane.b32.xlu0 %v2092, 96
        %v2109 = vpop.permute.xlu0 %2108
        %s2112 = scalar_lea.vmem %s259, 32 [#allocation4]
        %2113 = vst.msk [vmem:[%s2112] sm:$0xff] %vm1443, %v2107
        %2114 = vst.msk [vmem:[%s2112 + $0x8] sm:$0xff] %vm1443, %v2109
        %2115 = vrot.lane.b32.xlu0 %v2091, 80
        %v2116 = vpop.permute.xlu0 %2115
        %2117 = vrot.lane.b32.xlu0 %v2092, 80
        %v2118 = vpop.permute.xlu0 %2117
        %s2121 = scalar_lea.vmem %s259, 48 [#allocation4]
        %2122 = vst.msk [vmem:[%s2121] sm:$0xff] %vm1443, %v2116
        %2123 = vst.msk [vmem:[%s2121 + $0x8] sm:$0xff] %vm1443, %v2118
        %s2124 = sand.u32 %s164, 1
        %s2125 = scalar_lea.sflag [#allocation5], %s2124
        %s2126 = sand.u32 %s164, 1
        %s2127 = smul.addr %s2126, 64
        %s2128 = scalar_lea.vmem [#allocation4], %s2127
        // Predicated region
        $region45: #{up_forward.1} parent=43 // pred_check
          %p2129 = pneg %p174
        $region46: #{up_forward.1} parent=43 // pred_check_branch
          %2131 = sbr.rel (%p2129) target = $region48
        $region47: #{up_forward.1} parent=43 // pred_region
          %s2133 = ssub.s32 1024, 1024
          %2134 = vsyncadd %s2125, %s2133
          %s2135 = smul.addr %s20, 8
          %s2136 = smul.addr %s2135, 128
          %s2137 = scalar_lea.hbm %s6, %s2136
          %s2138 = sshll.u32 %s2128, 4
          %s2139 = int_to_ptr.vmem [resolvable:$true] %s2138
          %2144 = dma.vmem_to_hbm [thread:$0]  %s2139, 1024, %s2137, %s2125, 128, 128, 8
        $region48: #{up_forward.1} parent=43 // pred_fallthru
          _
      $region44: #{up_forward.1} parent=5 // pred_fallthru
        _
      %p2145 = scmp.le.s32.totalorder 2, %s15
      // Predicated region
      $region49: #{up_forward.1} parent=5 // pred_check
        %p2146 = pneg %p2145
      $region50: #{up_forward.1} parent=5 // pred_check_branch
        %2148 = sbr.rel (%p2146) target = $region52
      $region51: #{up_forward.1} parent=5 // pred_region
        %s2149 = ssub.s32 %s15, 2
        // Predicated region
        $region53: #{up_forward.1} parent=51 // pred_check
          %p2150 = pneg %p180
        $region54: #{up_forward.1} parent=51 // pred_check_branch
          %2152 = sbr.rel (%p2150) target = $region56
        $region55: #{up_forward.1} parent=51 // pred_region
          %s2153 = sand.u32 %s165, 1
          %s2154 = scalar_lea.sflag [#allocation5], %s2153
          %s2155 = sand.u32 %s165, 1
          %s2156 = smul.addr %s2155, 64
          %s2157 = scalar_lea.vmem [#allocation4], %s2156
          %2158 = dma.done %s2154, 1024
        $region56: #{up_forward.1} parent=51 // pred_fallthru
          _
      $region52: #{up_forward.1} parent=5 // pred_fallthru
        _
    $region6: #{up_forward.1} parent=1 // loop_footer
      %s19 = sadd.s32 1, %s15
    $region7: #{up_forward.1} parent=1 // loop_footer_branch
      %14 = sbr.rel target = $region3
    $region8: #{up_forward.1} parent=1 // loop_exit
      _
    %2159 = vsyncpa [#allocation5], 1
    %s2160 = scalar_lea.sflag [#allocation5], 1
    %2161 = vsyncpa %s2160, 1

</llo_original>
